<compile_context>
chip_gen: v7x
topology: tpu7x:2x2x1
jax: 0.10.0
libtpu: 0.0.40
codegen_flags: <defaults>
</compile_context>

<pallas_src>
import functools

import jax
import jax.numpy as jnp
import numpy as np
from jax.experimental import pallas as pl
from jax.experimental.pallas import tpu as pltpu


# ----------------------------------------------------------------------------
# Pallas kernels
# ----------------------------------------------------------------------------
def _conv_rows_kernel(x_ref, t_ref, b_ref, o_ref, *, n_taps, relu):
    """Implicit-im2col conv on one image's row slab.

    x_ref : (rows, K)       bf16  padded (and row-paired) image rows, K = (stride*Wp)*Cin
    t_ref : (n_taps, K, N)  bf16  Toeplitz-expanded weights, N = Wout*Cout (lane-dense)
    b_ref : (1, N)          f32   bias tiled over output width
    o_ref : (Hout, N)             output rows
    """
    ho = o_ref.shape[0]
    acc = jnp.zeros(o_ref.shape, jnp.float32)
    for d in range(n_taps):  # static, unrolled tap loop -> MXU matmuls accumulate in f32
        acc = acc + jnp.dot(x_ref[d:d + ho, :], t_ref[d],
                            preferred_element_type=jnp.float32)
    acc = acc + b_ref[...]
    if relu:
        acc = jnp.maximum(acc, 0.0)
    o_ref[...] = acc.astype(o_ref.dtype)


def _fpn_merge_kernel(f1_ref, f2_ref, t1_ref, t2_ref, b_ref, o_ref):
    """decoded = lat1(f1) + nearest_up2(lat2(f2)); the 2x upsample is folded into t2."""
    l1 = jnp.dot(f1_ref[...], t1_ref[...], preferred_element_type=jnp.float32)
    l2 = jnp.dot(f2_ref[...], t2_ref[...], preferred_element_type=jnp.float32)
    o_ref[...] = (l1 + l2 + b_ref[...]).astype(o_ref.dtype)


def _head_kernel(x_ref, th_ref, bh_ref, tc_ref, bc_ref, o_ref, *, n_taps):
    """prediction head: conv3x3(ReLU) fused with the 1x1 classifier epilogue."""
    ho = o_ref.shape[0]
    acc = jnp.zeros((ho, th_ref.shape[2]), jnp.float32)
    for d in range(n_taps):
        acc = acc + jnp.dot(x_ref[d:d + ho, :], th_ref[d],
                            preferred_element_type=jnp.float32)
    h = jnp.maximum(acc + bh_ref[...], 0.0).astype(tc_ref.dtype)       # bf16 hidden, stays in VMEM
    logits = jnp.dot(h, tc_ref[...], preferred_element_type=jnp.float32) + bc_ref[...]
    o_ref[...] = logits.astype(o_ref.dtype)


# ----------------------------------------------------------------------------
# pallas_call wrappers (grid over batch, per-image row slabs)
# ----------------------------------------------------------------------------
def conv_rows(x, t, b_row, *, relu, out_dtype):
    """conv as row-slab matmuls. x:(B, rows, K) bf16, t:(n_taps, K, N) bf16, b:(1, N) f32."""
    B, hs, k = x.shape
    n_taps, kt, n = t.shape
    assert kt == k and b_row.shape == (1, n)
    ho = hs - n_taps + 1
    return pl.pallas_call(
        functools.partial(_conv_rows_kernel, n_taps=n_taps, relu=relu),
        out_shape=jax.ShapeDtypeStruct((B, ho, n), out_dtype),
        grid_spec=pltpu.PrefetchScalarGridSpec(
            num_scalar_prefetch=0,
            grid=(B,),
            in_specs=[
                pl.BlockSpec((None, hs, k), lambda b: (b, 0, 0)),
                pl.BlockSpec((n_taps, k, n), lambda b: (0, 0, 0)),
                pl.BlockSpec((1, n), lambda b: (0, 0)),
            ],
            out_specs=pl.BlockSpec((None, ho, n), lambda b: (b, 0, 0)),
        ),
        compiler_params=pltpu.CompilerParams(dimension_semantics=("parallel",)),
    )(x, t, b_row)


def fpn_merge(f1_pairs, f2, t1, t2, b_row, *, out_dtype):
    """Fused feature_decoder merge: lat1(f1) + upsample2x(lat2(f2)) in one kernel."""
    B, r, k1 = f1_pairs.shape
    _, r2, k2 = f2.shape
    n = t1.shape[1]
    assert r2 == r and t1.shape[0] == k1 and t2.shape == (k2, n) and b_row.shape == (1, n)
    return pl.pallas_call(
        _fpn_merge_kernel,
        out_shape=jax.ShapeDtypeStruct((B, r, n), out_dtype),
        grid_spec=pltpu.PrefetchScalarGridSpec(
            num_scalar_prefetch=0,
            grid=(B,),
            in_specs=[
                pl.BlockSpec((None, r, k1), lambda b: (b, 0, 0)),
                pl.BlockSpec((None, r, k2), lambda b: (b, 0, 0)),
                pl.BlockSpec((k1, n), lambda b: (0, 0)),
                pl.BlockSpec((k2, n), lambda b: (0, 0)),
                pl.BlockSpec((1, n), lambda b: (0, 0)),
            ],
            out_specs=pl.BlockSpec((None, r, n), lambda b: (b, 0, 0)),
        ),
        compiler_params=pltpu.CompilerParams(dimension_semantics=("parallel",)),
    )(f1_pairs, f2, t1, t2, b_row)


def head_predict(x, th, bh, tc, bc):
    """Fused prediction_head: conv3x3(ReLU) + 1x1 classifier (lane-padded classes)."""
    B, hs, k = x.shape
    n_taps, kt, nh = th.shape
    nc = tc.shape[1]
    assert kt == k and tc.shape[0] == nh and bh.shape == (1, nh) and bc.shape == (1, nc)
    ho = hs - n_taps + 1
    return pl.pallas_call(
        functools.partial(_head_kernel, n_taps=n_taps),
        out_shape=jax.ShapeDtypeStruct((B, ho, nc), jnp.float32),
        grid_spec=pltpu.PrefetchScalarGridSpec(
            num_scalar_prefetch=0,
            grid=(B,),
            in_specs=[
                pl.BlockSpec((None, hs, k), lambda b: (b, 0, 0)),
                pl.BlockSpec((n_taps, k, nh), lambda b: (0, 0, 0)),
                pl.BlockSpec((1, nh), lambda b: (0, 0)),
                pl.BlockSpec((nh, nc), lambda b: (0, 0)),
                pl.BlockSpec((1, nc), lambda b: (0, 0)),
            ],
            out_specs=pl.BlockSpec((None, ho, nc), lambda b: (b, 0, 0)),
        ),
        compiler_params=pltpu.CompilerParams(dimension_semantics=("parallel",)),
    )(x, th, bh, tc, bc)


# ----------------------------------------------------------------------------
# Init-time weight tables (built once; bf16; no per-call reshapes/casts)
# ----------------------------------------------------------------------------
def _toeplitz_conv_table(w, bias, *, stride, w_padded, w_out):
    """Expand a (kh,kw,cin,cout) conv into per-row-tap matmul tables.

    Input rows are flattened as (row, w_padded*cin); for stride>1 `stride` adjacent padded
    rows are paired on the lane axis, so one tap reads K = stride*w_padded*cin lanes.
    Output lanes are w_out*cout (lane-dense).
    """
    kh, kw, cin, cout = w.shape
    n_taps = (kh - 1) // stride + 1
    K = stride * w_padded * cin
    N = w_out * cout
    t = np.zeros((n_taps, K, N), np.float32)
    for i in range(kh):
        d, r = divmod(i, stride)
        for j in range(kw):
            for ow in range(w_out):
                iw = ow * stride + j
                k0 = (r * w_padded + iw) * cin
                n0 = ow * cout
                t[d, k0:k0 + cin, n0:n0 + cout] += w[i, j]
    b_row = np.tile(np.asarray(bias, np.float32), w_out)[None, :]
    return t, b_row


def _init_conv(key, kh, kw, cin, cout):
    fan_in = kh * kw * cin
    w = jax.random.normal(key, (kh, kw, cin, cout), jnp.float32) * (2.0 / fan_in) ** 0.5
    b = jnp.zeros((cout,), jnp.float32)
    return w, b


def build_params(key, *, in_ch=3, enc_ch=(16, 32), dec_ch=16, num_classes=5,
                 height=16, width=16, class_pad=16):
    ks = jax.random.split(key, 6)
    raw = {
        "enc1": _init_conv(ks[0], 3, 3, in_ch, enc_ch[0]),
        "enc2": _init_conv(ks[1], 3, 3, enc_ch[0], enc_ch[1]),
        "lat1": _init_conv(ks[2], 1, 1, enc_ch[0], dec_ch),
        "lat2": _init_conv(ks[3], 1, 1, enc_ch[1], dec_ch),
        "head": _init_conv(ks[4], 3, 3, dec_ch, dec_ch),
        "cls":  _init_conv(ks[5], 1, 1, dec_ch, num_classes),
    }
    np_ = lambda a: np.asarray(a, np.float32)
    w1 = width // 2            # stride-2 feature width
    w2 = w1 // 2               # stride-4 feature width

    t_e1, b_e1 = _toeplitz_conv_table(np_(raw["enc1"][0]), np_(raw["enc1"][1]),
                                      stride=2, w_padded=width + 2, w_out=w1)
    t_e2, b_e2 = _toeplitz_conv_table(np_(raw["enc2"][0]), np_(raw["enc2"][1]),
                                      stride=2, w_padded=w1 + 2, w_out=w2)
    t_hd, b_hd = _toeplitz_conv_table(np_(raw["head"][0]), np_(raw["head"][1]),
                                      stride=1, w_padded=w1 + 2, w_out=w1)

    # feature_decoder: lat1 on row pairs (block-diag) + lat2 with nearest-2x upsample folded in
    t_l1 = _toeplitz_conv_table(np_(raw["lat1"][0]), np_(raw["lat1"][1]),
                                stride=1, w_padded=w1, w_out=w1)[0][0]      # (w1*dec, w1*dec)
    n1 = t_l1.shape[0]
    t1p = np.zeros((2 * n1, 2 * n1), np.float32)
    t1p[:n1, :n1] = t_l1
    t1p[n1:, n1:] = t_l1
    wl2 = np_(raw["lat2"][0])[0, 0]                                          # (enc_ch[1], dec)
    t2u = np.zeros((w2 * enc_ch[1], w1 * dec_ch), np.float32)
    for wh in range(w1):                                                     # nearest upsample in w
        wl = wh // 2
        t2u[wl * enc_ch[1]:(wl + 1) * enc_ch[1], wh * dec_ch:(wh + 1) * dec_ch] = wl2
    t2p = np.concatenate([t2u, t2u], axis=1)                                 # both sub-rows of a pair
    b_dec = np.tile(np_(raw["lat1"][1]) + np_(raw["lat2"][1]), 2 * w1)[None, :]

    # classifier 1x1, classes zero-padded to a lane-friendly width
    w_cls = np.zeros((1, 1, dec_ch, class_pad), np.float32)
    w_cls[..., :num_classes] = np_(raw["cls"][0])
    b_cls = np.zeros((class_pad,), np.float32)
    b_cls[:num_classes] = np_(raw["cls"][1])
    t_cl, b_cl = _toeplitz_conv_table(w_cls, b_cls, stride=1, w_padded=w1, w_out=w1)
    t_cl = t_cl[0]

    bf = jnp.bfloat16
    params = {
        "enc1_t": jnp.asarray(t_e1, bf), "enc1_b": jnp.asarray(b_e1),
        "enc2_t": jnp.asarray(t_e2, bf), "enc2_b": jnp.asarray(b_e2),
        "dec_t1": jnp.asarray(t1p, bf),  "dec_t2": jnp.asarray(t2p, bf),
        "dec_b":  jnp.asarray(b_dec),
        "head_t": jnp.asarray(t_hd, bf), "head_b": jnp.asarray(b_hd),
        "cls_t":  jnp.asarray(t_cl, bf), "cls_b":  jnp.asarray(b_cl),
    }
    return params, raw


# ----------------------------------------------------------------------------
# ModelBase.forward equivalent
# ----------------------------------------------------------------------------
def model_forward(params, images_nchw, targets=None, *, num_classes=5):
    B, C, H, W = images_nchw.shape
    assert H % 4 == 0 and W % 4 == 0

    # --- feature_extractor ---------------------------------------------------
    x = jnp.transpose(images_nchw, (0, 2, 3, 1))                   # NHWC
    x = jnp.pad(x, ((0, 0), (1, 1), (1, 1), (0, 0)))               # (B, H+2, W+2, C)
    x = x.reshape(B, (H + 2) // 2, 2 * (W + 2) * C).astype(jnp.bfloat16)   # paired rows
    f1 = conv_rows(x, params["enc1_t"], params["enc1_b"], relu=True,
                   out_dtype=jnp.bfloat16)                          # (B, H/2, (W/2)*c1)

    c1 = f1.shape[2] // (W // 2)
    f1_pad = jnp.pad(f1, ((0, 0), (1, 1), (c1, c1)))
    f1_pairs = f1_pad.reshape(B, f1_pad.shape[1] // 2, 2 * f1_pad.shape[2])
    f2 = conv_rows(f1_pairs, params["enc2_t"], params["enc2_b"], relu=True,
                   out_dtype=jnp.bfloat16)                          # (B, H/4, (W/4)*c2)

    # --- feature_decoder: fused lat1 + upsampled lat2 + add ------------------
    f1_rowpairs = f1.reshape(B, f1.shape[1] // 2, 2 * f1.shape[2])
    dec_pairs = fpn_merge(f1_rowpairs, f2, params["dec_t1"], params["dec_t2"],
                          params["dec_b"], out_dtype=jnp.bfloat16)  # (B, H/4, 2*(W/2)*dec)
    decoded = dec_pairs.reshape(B, 2 * dec_pairs.shape[1], dec_pairs.shape[2] // 2)

    # --- prediction_head: fused conv3x3(ReLU) + 1x1 classifier ----------------
    cd = decoded.shape[2] // (W // 2)
    dec_pad = jnp.pad(decoded, ((0, 0), (1, 1), (cd, cd)))
    logits_rows = head_predict(dec_pad, params["head_t"], params["head_b"],
                               params["cls_t"], params["cls_b"])    # (B, H/2, (W/2)*16) f32

    logits = logits_rows.reshape(B, H // 2, W // 2, -1)[..., :num_classes]
    # TODO(synk): targets-dependent loss inside the prediction head is config-defined in the
    # original repo and not reproducible here.
    return {"logits": jnp.transpose(logits, (0, 3, 1, 2))}          # back to NCHW


# ----------------------------------------------------------------------------
# Pure-JAX reference (same bf16 rounding points) for a numerical sanity check
# ----------------------------------------------------------------------------
def reference_forward(raw, images_nchw):
    bf = jnp.bfloat16

    def conv(x, wb, stride, pad, relu):
        w, b = wb
        y = jax.lax.conv_general_dilated(
            x.astype(bf), w.astype(bf), window_strides=(stride, stride),
            padding=[(pad, pad), (pad, pad)],
            dimension_numbers=("NHWC", "HWIO", "NHWC"),
            preferred_element_type=jnp.float32)
        y = y + b[None, None, None, :]
        return jnp.maximum(y, 0.0) if relu else y

    x = jnp.transpose(images_nchw, (0, 2, 3, 1)).astype(jnp.float32)
    f1 = conv(x, raw["enc1"], 2, 1, True).astype(bf)
    f2 = conv(f1, raw["enc2"], 2, 1, True).astype(bf)
    l1 = conv(f1, raw["lat1"], 1, 0, False)
    l2 = conv(f2, raw["lat2"], 1, 0, False)
    l2_up = jnp.repeat(jnp.repeat(l2, 2, axis=1), 2, axis=2)
    decoded = (l1 + l2_up).astype(bf)
    h = conv(decoded, raw["head"], 1, 1, True).astype(bf)
    logits = conv(h, raw["cls"], 1, 0, False)
    return jnp.transpose(logits, (0, 3, 1, 2))


if __name__ == "__main__":
    key = jax.random.PRNGKey(0)
    pkey, xkey = jax.random.split(key)
    params, raw = build_params(pkey)
    images = jax.random.normal(xkey, (2, 3, 16, 16), jnp.float32)   # NCHW

    fwd = jax.jit(model_forward)
    out = fwd(params, images)
    logits = jax.block_until_ready(out["logits"])
    assert logits.shape == (2, 5, 8, 8), logits.shape

    ref = np.asarray(reference_forward(raw, images), np.float32)
    np.testing.assert_allclose(np.asarray(logits, np.float32), ref, rtol=0.1, atol=0.1)
    print("KERNEL_OK")
</pallas_src>

<mosaic_0001>
module attributes {stable_mosaic.version = 11 : i64} {
  func.func @_conv_rows_kernel(%arg0: i32, %arg1: memref<1x9x108xbf16, #tpu.memory_space<vmem>>, %arg2: memref<2x108x128xbf16, #tpu.memory_space<vmem>>, %arg3: memref<1x128xf32, #tpu.memory_space<vmem>>, %arg4: memref<1x8x128xbf16, #tpu.memory_space<vmem>>) attributes {dimension_semantics = [#tpu.dimension_semantics<parallel>], iteration_bounds = array<i64: 2>, scalar_prefetch = 0 : i64, scratch_operands = 0 : i64, tpu.core_type = #tpu.core_type<tc>, window_params = [{transform_indices = @transform_0, window_bounds = array<i64: 1, 9, 108>}, {pipeline_mode = #tpu.pipeline_mode<synchronous>, transform_indices = @transform_1, window_bounds = array<i64: 2, 108, 128>}, {pipeline_mode = #tpu.pipeline_mode<synchronous>, transform_indices = @transform_2, window_bounds = array<i64: 1, 128>}, {transform_indices = @transform_3, window_bounds = array<i64: 1, 8, 128>}]} {
    %cst = arith.constant 0.000000e+00 : f32
    %0 = vector.broadcast %cst : f32 to vector<8x128xf32>
    %c0 = arith.constant 0 : index
    %c0_0 = arith.constant 0 : index
    %c0_1 = arith.constant 0 : index
    %1 = vector.load %arg1[%c0, %c0_0, %c0_1] : memref<1x9x108xbf16, #tpu.memory_space<vmem>>, vector<1x8x108xbf16>
    %2 = vector.shape_cast %1 : vector<1x8x108xbf16> to vector<8x108xbf16>
    %c0_2 = arith.constant 0 : index
    %c0_3 = arith.constant 0 : index
    %c0_4 = arith.constant 0 : index
    %3 = vector.load %arg2[%c0_2, %c0_3, %c0_4] : memref<2x108x128xbf16, #tpu.memory_space<vmem>>, vector<1x108x128xbf16>
    %4 = vector.shape_cast %3 : vector<1x108x128xbf16> to vector<108x128xbf16>
    %cst_5 = arith.constant dense<0.000000e+00> : vector<8x128xf32>
    %5 = tpu.matmul %2, %4, %cst_5 {dimension_numbers = #tpu.dot_dimension_numbers<[1], [0], [0], [1], [0, 0, 1, 1], [], []>} : vector<8x108xbf16>, vector<108x128xbf16>, vector<8x128xf32> -> vector<8x128xf32>
    %6 = arith.addf %0, %5 : vector<8x128xf32>
    %c0_6 = arith.constant 0 : index
    %c1 = arith.constant 1 : index
    %c0_7 = arith.constant 0 : index
    %7 = vector.load %arg1[%c0_6, %c1, %c0_7] : memref<1x9x108xbf16, #tpu.memory_space<vmem>>, vector<1x8x108xbf16>
    %8 = vector.shape_cast %7 : vector<1x8x108xbf16> to vector<8x108xbf16>
    %c1_8 = arith.constant 1 : index
    %c0_9 = arith.constant 0 : index
    %c0_10 = arith.constant 0 : index
    %9 = vector.load %arg2[%c1_8, %c0_9, %c0_10] : memref<2x108x128xbf16, #tpu.memory_space<vmem>>, vector<1x108x128xbf16>
    %10 = vector.shape_cast %9 : vector<1x108x128xbf16> to vector<108x128xbf16>
    %cst_11 = arith.constant dense<0.000000e+00> : vector<8x128xf32>
    %11 = tpu.matmul %8, %10, %cst_11 {dimension_numbers = #tpu.dot_dimension_numbers<[1], [0], [0], [1], [0, 0, 1, 1], [], []>} : vector<8x108xbf16>, vector<108x128xbf16>, vector<8x128xf32> -> vector<8x128xf32>
    %12 = arith.addf %6, %11 : vector<8x128xf32>
    %c0_12 = arith.constant 0 : index
    %c0_13 = arith.constant 0 : index
    %13 = vector.load %arg3[%c0_12, %c0_13] : memref<1x128xf32, #tpu.memory_space<vmem>>, vector<1x128xf32>
    %14 = vector.broadcast %13 : vector<1x128xf32> to vector<8x128xf32>
    %15 = arith.addf %12, %14 : vector<8x128xf32>
    %cst_14 = arith.constant 0.000000e+00 : f32
    %16 = vector.broadcast %cst_14 : f32 to vector<8x128xf32>
    %17 = arith.maximumf %15, %16 : vector<8x128xf32>
    %18 = arith.truncf %17 : vector<8x128xf32> to vector<8x128xbf16>
    %c0_15 = arith.constant 0 : index
    %c0_16 = arith.constant 0 : index
    %c0_17 = arith.constant 0 : index
    %19 = vector.load %arg4[%c0_15, %c0_16, %c0_17] : memref<1x8x128xbf16, #tpu.memory_space<vmem>>, vector<1x8x128xbf16>
    %20 = vector.shape_cast %19 : vector<1x8x128xbf16> to vector<8x128xbf16>
    %21 = vector.shape_cast %18 : vector<8x128xbf16> to vector<1x8x128xbf16>
    tpu.vector_store %arg4[%c0_15, %c0_16, %c0_17], %21 {strides = array<i32>} : memref<1x8x128xbf16, #tpu.memory_space<vmem>>, vector<1x8x128xbf16>,
    return
  }
  func.func @transform_0(%arg0: i32) -> (i32, i32, i32) {
    %c0_i32 = arith.constant 0 : i32
    %c0_i32_0 = arith.constant 0 : i32
    %c0_i32_1 = arith.constant 0 : i32
    return %arg0, %c0_i32, %c0_i32_0 : i32, i32, i32
  }
  func.func @transform_1(%arg0: i32) -> (i32, i32, i32) {
    %c0_i32 = arith.constant 0 : i32
    %c0_i32_0 = arith.constant 0 : i32
    %c0_i32_1 = arith.constant 0 : i32
    %c0_i32_2 = arith.constant 0 : i32
    return %c0_i32, %c0_i32_0, %c0_i32_1 : i32, i32, i32
  }
  func.func @transform_2(%arg0: i32) -> (i32, i32) {
    %c0_i32 = arith.constant 0 : i32
    %c0_i32_0 = arith.constant 0 : i32
    %c0_i32_1 = arith.constant 0 : i32
    return %c0_i32, %c0_i32_0 : i32, i32
  }
  func.func @transform_3(%arg0: i32) -> (i32, i32, i32) {
    %c0_i32 = arith.constant 0 : i32
    %c0_i32_0 = arith.constant 0 : i32
    %c0_i32_1 = arith.constant 0 : i32
    return %arg0, %c0_i32, %c0_i32_0 : i32, i32, i32
  }
}

module attributes {stable_mosaic.version = 11 : i64} {
  func.func @_conv_rows_kernel(%arg0: i32, %arg1: memref<1x5x320xbf16, #tpu.memory_space<vmem>>, %arg2: memref<2x320x128xbf16, #tpu.memory_space<vmem>>, %arg3: memref<1x128xf32, #tpu.memory_space<vmem>>, %arg4: memref<1x4x128xbf16, #tpu.memory_space<vmem>>) attributes {dimension_semantics = [#tpu.dimension_semantics<parallel>], iteration_bounds = array<i64: 2>, scalar_prefetch = 0 : i64, scratch_operands = 0 : i64, tpu.core_type = #tpu.core_type<tc>, window_params = [{transform_indices = @transform_0, window_bounds = array<i64: 1, 5, 320>}, {pipeline_mode = #tpu.pipeline_mode<synchronous>, transform_indices = @transform_1, window_bounds = array<i64: 2, 320, 128>}, {pipeline_mode = #tpu.pipeline_mode<synchronous>, transform_indices = @transform_2, window_bounds = array<i64: 1, 128>}, {transform_indices = @transform_3, window_bounds = array<i64: 1, 4, 128>}]} {
    %cst = arith.constant 0.000000e+00 : f32
    %0 = vector.broadcast %cst : f32 to vector<4x128xf32>
    %c0 = arith.constant 0 : index
    %c0_0 = arith.constant 0 : index
    %c0_1 = arith.constant 0 : index
    %1 = vector.load %arg1[%c0, %c0_0, %c0_1] : memref<1x5x320xbf16, #tpu.memory_space<vmem>>, vector<1x4x320xbf16>
    %2 = vector.shape_cast %1 : vector<1x4x320xbf16> to vector<4x320xbf16>
    %c0_2 = arith.constant 0 : index
    %c0_3 = arith.constant 0 : index
    %c0_4 = arith.constant 0 : index
    %3 = vector.load %arg2[%c0_2, %c0_3, %c0_4] : memref<2x320x128xbf16, #tpu.memory_space<vmem>>, vector<1x320x128xbf16>
    %4 = vector.shape_cast %3 : vector<1x320x128xbf16> to vector<320x128xbf16>
    %cst_5 = arith.constant dense<0.000000e+00> : vector<4x128xf32>
    %5 = tpu.matmul %2, %4, %cst_5 {dimension_numbers = #tpu.dot_dimension_numbers<[1], [0], [0], [1], [0, 0, 1, 1], [], []>} : vector<4x320xbf16>, vector<320x128xbf16>, vector<4x128xf32> -> vector<4x128xf32>
    %6 = arith.addf %0, %5 : vector<4x128xf32>
    %c0_6 = arith.constant 0 : index
    %c1 = arith.constant 1 : index
    %c0_7 = arith.constant 0 : index
    %7 = vector.load %arg1[%c0_6, %c1, %c0_7] : memref<1x5x320xbf16, #tpu.memory_space<vmem>>, vector<1x4x320xbf16>
    %8 = vector.shape_cast %7 : vector<1x4x320xbf16> to vector<4x320xbf16>
    %c1_8 = arith.constant 1 : index
    %c0_9 = arith.constant 0 : index
    %c0_10 = arith.constant 0 : index
    %9 = vector.load %arg2[%c1_8, %c0_9, %c0_10] : memref<2x320x128xbf16, #tpu.memory_space<vmem>>, vector<1x320x128xbf16>
    %10 = vector.shape_cast %9 : vector<1x320x128xbf16> to vector<320x128xbf16>
    %cst_11 = arith.constant dense<0.000000e+00> : vector<4x128xf32>
    %11 = tpu.matmul %8, %10, %cst_11 {dimension_numbers = #tpu.dot_dimension_numbers<[1], [0], [0], [1], [0, 0, 1, 1], [], []>} : vector<4x320xbf16>, vector<320x128xbf16>, vector<4x128xf32> -> vector<4x128xf32>
    %12 = arith.addf %6, %11 : vector<4x128xf32>
    %c0_12 = arith.constant 0 : index
    %c0_13 = arith.constant 0 : index
    %13 = vector.load %arg3[%c0_12, %c0_13] : memref<1x128xf32, #tpu.memory_space<vmem>>, vector<1x128xf32>
    %14 = vector.broadcast %13 : vector<1x128xf32> to vector<4x128xf32>
    %15 = arith.addf %12, %14 : vector<4x128xf32>
    %cst_14 = arith.constant 0.000000e+00 : f32
    %16 = vector.broadcast %cst_14 : f32 to vector<4x128xf32>
    %17 = arith.maximumf %15, %16 : vector<4x128xf32>
    %18 = arith.truncf %17 : vector<4x128xf32> to vector<4x128xbf16>
    %c0_15 = arith.constant 0 : index
    %c0_16 = arith.constant 0 : index
    %c0_17 = arith.constant 0 : index
    %19 = vector.load %arg4[%c0_15, %c0_16, %c0_17] : memref<1x4x128xbf16, #tpu.memory_space<vmem>>, vector<1x4x128xbf16>
    %20 = vector.shape_cast %19 : vector<1x4x128xbf16> to vector<4x128xbf16>
    %21 = vector.shape_cast %18 : vector<4x128xbf16> to vector<1x4x128xbf16>
    tpu.vector_store %arg4[%c0_15, %c0_16, %c0_17], %21 {strides = array<i32>} : memref<1x4x128xbf16, #tpu.memory_space<vmem>>, vector<1x4x128xbf16>,
    return
  }
  func.func @transform_0(%arg0: i32) -> (i32, i32, i32) {
    %c0_i32 = arith.constant 0 : i32
    %c0_i32_0 = arith.constant 0 : i32
    %c0_i32_1 = arith.constant 0 : i32
    return %arg0, %c0_i32, %c0_i32_0 : i32, i32, i32
  }
  func.func @transform_1(%arg0: i32) -> (i32, i32, i32) {
    %c0_i32 = arith.constant 0 : i32
    %c0_i32_0 = arith.constant 0 : i32
    %c0_i32_1 = arith.constant 0 : i32
    %c0_i32_2 = arith.constant 0 : i32
    return %c0_i32, %c0_i32_0, %c0_i32_1 : i32, i32, i32
  }
  func.func @transform_2(%arg0: i32) -> (i32, i32) {
    %c0_i32 = arith.constant 0 : i32
    %c0_i32_0 = arith.constant 0 : i32
    %c0_i32_1 = arith.constant 0 : i32
    return %c0_i32, %c0_i32_0 : i32, i32
  }
  func.func @transform_3(%arg0: i32) -> (i32, i32, i32) {
    %c0_i32 = arith.constant 0 : i32
    %c0_i32_0 = arith.constant 0 : i32
    %c0_i32_1 = arith.constant 0 : i32
    return %arg0, %c0_i32, %c0_i32_0 : i32, i32, i32
  }
}

module attributes {stable_mosaic.version = 11 : i64} {
  func.func @_fpn_merge_kernel(%arg0: i32, %arg1: memref<1x4x256xbf16, #tpu.memory_space<vmem>>, %arg2: memref<1x4x128xbf16, #tpu.memory_space<vmem>>, %arg3: memref<256x256xbf16, #tpu.memory_space<vmem>>, %arg4: memref<128x256xbf16, #tpu.memory_space<vmem>>, %arg5: memref<1x256xf32, #tpu.memory_space<vmem>>, %arg6: memref<1x4x256xbf16, #tpu.memory_space<vmem>>) attributes {dimension_semantics = [#tpu.dimension_semantics<parallel>], iteration_bounds = array<i64: 2>, scalar_prefetch = 0 : i64, scratch_operands = 0 : i64, tpu.core_type = #tpu.core_type<tc>, window_params = [{transform_indices = @transform_0, window_bounds = array<i64: 1, 4, 256>}, {transform_indices = @transform_1, window_bounds = array<i64: 1, 4, 128>}, {pipeline_mode = #tpu.pipeline_mode<synchronous>, transform_indices = @transform_2, window_bounds = array<i64: 256, 256>}, {pipeline_mode = #tpu.pipeline_mode<synchronous>, transform_indices = @transform_3, window_bounds = array<i64: 128, 256>}, {pipeline_mode = #tpu.pipeline_mode<synchronous>, transform_indices = @transform_4, window_bounds = array<i64: 1, 256>}, {transform_indices = @transform_5, window_bounds = array<i64: 1, 4, 256>}]} {
    %c0 = arith.constant 0 : index
    %c0_0 = arith.constant 0 : index
    %c0_1 = arith.constant 0 : index
    %0 = vector.load %arg1[%c0, %c0_0, %c0_1] : memref<1x4x256xbf16, #tpu.memory_space<vmem>>, vector<1x4x256xbf16>
    %1 = vector.shape_cast %0 : vector<1x4x256xbf16> to vector<4x256xbf16>
    %c0_2 = arith.constant 0 : index
    %c0_3 = arith.constant 0 : index
    %2 = vector.load %arg3[%c0_2, %c0_3] : memref<256x256xbf16, #tpu.memory_space<vmem>>, vector<256x256xbf16>
    %cst = arith.constant dense<0.000000e+00> : vector<4x256xf32>
    %3 = tpu.matmul %1, %2, %cst {dimension_numbers = #tpu.dot_dimension_numbers<[1], [0], [0], [1], [0, 0, 1, 1], [], []>} : vector<4x256xbf16>, vector<256x256xbf16>, vector<4x256xf32> -> vector<4x256xf32>
    %c0_4 = arith.constant 0 : index
    %c0_5 = arith.constant 0 : index
    %c0_6 = arith.constant 0 : index
    %4 = vector.load %arg2[%c0_4, %c0_5, %c0_6] : memref<1x4x128xbf16, #tpu.memory_space<vmem>>, vector<1x4x128xbf16>
    %5 = vector.shape_cast %4 : vector<1x4x128xbf16> to vector<4x128xbf16>
    %c0_7 = arith.constant 0 : index
    %c0_8 = arith.constant 0 : index
    %6 = vector.load %arg4[%c0_7, %c0_8] : memref<128x256xbf16, #tpu.memory_space<vmem>>, vector<128x256xbf16>
    %cst_9 = arith.constant dense<0.000000e+00> : vector<4x256xf32>
    %7 = tpu.matmul %5, %6, %cst_9 {dimension_numbers = #tpu.dot_dimension_numbers<[1], [0], [0], [1], [0, 0, 1, 1], [], []>} : vector<4x128xbf16>, vector<128x256xbf16>, vector<4x256xf32> -> vector<4x256xf32>
    %8 = arith.addf %3, %7 : vector<4x256xf32>
    %c0_10 = arith.constant 0 : index
    %c0_11 = arith.constant 0 : index
    %9 = vector.load %arg5[%c0_10, %c0_11] : memref<1x256xf32, #tpu.memory_space<vmem>>, vector<1x256xf32>
    %10 = vector.broadcast %9 : vector<1x256xf32> to vector<4x256xf32>
    %11 = arith.addf %8, %10 : vector<4x256xf32>
    %12 = arith.truncf %11 : vector<4x256xf32> to vector<4x256xbf16>
    %c0_12 = arith.constant 0 : index
    %c0_13 = arith.constant 0 : index
    %c0_14 = arith.constant 0 : index
    %13 = vector.load %arg6[%c0_12, %c0_13, %c0_14] : memref<1x4x256xbf16, #tpu.memory_space<vmem>>, vector<1x4x256xbf16>
    %14 = vector.shape_cast %13 : vector<1x4x256xbf16> to vector<4x256xbf16>
    %15 = vector.shape_cast %12 : vector<4x256xbf16> to vector<1x4x256xbf16>
    tpu.vector_store %arg6[%c0_12, %c0_13, %c0_14], %15 {strides = array<i32>} : memref<1x4x256xbf16, #tpu.memory_space<vmem>>, vector<1x4x256xbf16>,
    return
  }
  func.func @transform_0(%arg0: i32) -> (i32, i32, i32) {
    %c0_i32 = arith.constant 0 : i32
    %c0_i32_0 = arith.constant 0 : i32
    %c0_i32_1 = arith.constant 0 : i32
    return %arg0, %c0_i32, %c0_i32_0 : i32, i32, i32
  }
  func.func @transform_1(%arg0: i32) -> (i32, i32, i32) {
    %c0_i32 = arith.constant 0 : i32
    %c0_i32_0 = arith.constant 0 : i32
    %c0_i32_1 = arith.constant 0 : i32
    return %arg0, %c0_i32, %c0_i32_0 : i32, i32, i32
  }
  func.func @transform_2(%arg0: i32) -> (i32, i32) {
    %c0_i32 = arith.constant 0 : i32
    %c0_i32_0 = arith.constant 0 : i32
    %c0_i32_1 = arith.constant 0 : i32
    return %c0_i32, %c0_i32_0 : i32, i32
  }
  func.func @transform_3(%arg0: i32) -> (i32, i32) {
    %c0_i32 = arith.constant 0 : i32
    %c0_i32_0 = arith.constant 0 : i32
    %c0_i32_1 = arith.constant 0 : i32
    return %c0_i32, %c0_i32_0 : i32, i32
  }
  func.func @transform_4(%arg0: i32) -> (i32, i32) {
    %c0_i32 = arith.constant 0 : i32
    %c0_i32_0 = arith.constant 0 : i32
    %c0_i32_1 = arith.constant 0 : i32
    return %c0_i32, %c0_i32_0 : i32, i32
  }
  func.func @transform_5(%arg0: i32) -> (i32, i32, i32) {
    %c0_i32 = arith.constant 0 : i32
    %c0_i32_0 = arith.constant 0 : i32
    %c0_i32_1 = arith.constant 0 : i32
    return %arg0, %c0_i32, %c0_i32_0 : i32, i32, i32
  }
}

module attributes {stable_mosaic.version = 11 : i64} {
  func.func @_head_kernel(%arg0: i32, %arg1: memref<1x10x160xbf16, #tpu.memory_space<vmem>>, %arg2: memref<3x160x128xbf16, #tpu.memory_space<vmem>>, %arg3: memref<1x128xf32, #tpu.memory_space<vmem>>, %arg4: memref<128x128xbf16, #tpu.memory_space<vmem>>, %arg5: memref<1x128xf32, #tpu.memory_space<vmem>>, %arg6: memref<1x8x128xf32, #tpu.memory_space<vmem>>) attributes {dimension_semantics = [#tpu.dimension_semantics<parallel>], iteration_bounds = array<i64: 2>, scalar_prefetch = 0 : i64, scratch_operands = 0 : i64, tpu.core_type = #tpu.core_type<tc>, window_params = [{transform_indices = @transform_0, window_bounds = array<i64: 1, 10, 160>}, {pipeline_mode = #tpu.pipeline_mode<synchronous>, transform_indices = @transform_1, window_bounds = array<i64: 3, 160, 128>}, {pipeline_mode = #tpu.pipeline_mode<synchronous>, transform_indices = @transform_2, window_bounds = array<i64: 1, 128>}, {pipeline_mode = #tpu.pipeline_mode<synchronous>, transform_indices = @transform_3, window_bounds = array<i64: 128, 128>}, {pipeline_mode = #tpu.pipeline_mode<synchronous>, transform_indices = @transform_4, window_bounds = array<i64: 1, 128>}, {transform_indices = @transform_5, window_bounds = array<i64: 1, 8, 128>}]} {
    %cst = arith.constant 0.000000e+00 : f32
    %0 = vector.broadcast %cst : f32 to vector<8x128xf32>
    %c0 = arith.constant 0 : index
    %c0_0 = arith.constant 0 : index
    %c0_1 = arith.constant 0 : index
    %1 = vector.load %arg1[%c0, %c0_0, %c0_1] : memref<1x10x160xbf16, #tpu.memory_space<vmem>>, vector<1x8x160xbf16>
    %2 = vector.shape_cast %1 : vector<1x8x160xbf16> to vector<8x160xbf16>
    %c0_2 = arith.constant 0 : index
    %c0_3 = arith.constant 0 : index
    %c0_4 = arith.constant 0 : index
    %3 = vector.load %arg2[%c0_2, %c0_3, %c0_4] : memref<3x160x128xbf16, #tpu.memory_space<vmem>>, vector<1x160x128xbf16>
    %4 = vector.shape_cast %3 : vector<1x160x128xbf16> to vector<160x128xbf16>
    %cst_5 = arith.constant dense<0.000000e+00> : vector<8x128xf32>
    %5 = tpu.matmul %2, %4, %cst_5 {dimension_numbers = #tpu.dot_dimension_numbers<[1], [0], [0], [1], [0, 0, 1, 1], [], []>} : vector<8x160xbf16>, vector<160x128xbf16>, vector<8x128xf32> -> vector<8x128xf32>
    %6 = arith.addf %0, %5 : vector<8x128xf32>
    %c0_6 = arith.constant 0 : index
    %c1 = arith.constant 1 : index
    %c0_7 = arith.constant 0 : index
    %7 = vector.load %arg1[%c0_6, %c1, %c0_7] : memref<1x10x160xbf16, #tpu.memory_space<vmem>>, vector<1x8x160xbf16>
    %8 = vector.shape_cast %7 : vector<1x8x160xbf16> to vector<8x160xbf16>
    %c1_8 = arith.constant 1 : index
    %c0_9 = arith.constant 0 : index
    %c0_10 = arith.constant 0 : index
    %9 = vector.load %arg2[%c1_8, %c0_9, %c0_10] : memref<3x160x128xbf16, #tpu.memory_space<vmem>>, vector<1x160x128xbf16>
    %10 = vector.shape_cast %9 : vector<1x160x128xbf16> to vector<160x128xbf16>
    %cst_11 = arith.constant dense<0.000000e+00> : vector<8x128xf32>
    %11 = tpu.matmul %8, %10, %cst_11 {dimension_numbers = #tpu.dot_dimension_numbers<[1], [0], [0], [1], [0, 0, 1, 1], [], []>} : vector<8x160xbf16>, vector<160x128xbf16>, vector<8x128xf32> -> vector<8x128xf32>
    %12 = arith.addf %6, %11 : vector<8x128xf32>
    %c0_12 = arith.constant 0 : index
    %c2 = arith.constant 2 : index
    %c0_13 = arith.constant 0 : index
    %13 = vector.load %arg1[%c0_12, %c2, %c0_13] : memref<1x10x160xbf16, #tpu.memory_space<vmem>>, vector<1x8x160xbf16>
    %14 = vector.shape_cast %13 : vector<1x8x160xbf16> to vector<8x160xbf16>
    %c2_14 = arith.constant 2 : index
    %c0_15 = arith.constant 0 : index
    %c0_16 = arith.constant 0 : index
    %15 = vector.load %arg2[%c2_14, %c0_15, %c0_16] : memref<3x160x128xbf16, #tpu.memory_space<vmem>>, vector<1x160x128xbf16>
    %16 = vector.shape_cast %15 : vector<1x160x128xbf16> to vector<160x128xbf16>
    %cst_17 = arith.constant dense<0.000000e+00> : vector<8x128xf32>
    %17 = tpu.matmul %14, %16, %cst_17 {dimension_numbers = #tpu.dot_dimension_numbers<[1], [0], [0], [1], [0, 0, 1, 1], [], []>} : vector<8x160xbf16>, vector<160x128xbf16>, vector<8x128xf32> -> vector<8x128xf32>
    %18 = arith.addf %12, %17 : vector<8x128xf32>
    %c0_18 = arith.constant 0 : index
    %c0_19 = arith.constant 0 : index
    %19 = vector.load %arg3[%c0_18, %c0_19] : memref<1x128xf32, #tpu.memory_space<vmem>>, vector<1x128xf32>
    %20 = vector.broadcast %19 : vector<1x128xf32> to vector<8x128xf32>
    %21 = arith.addf %18, %20 : vector<8x128xf32>
    %cst_20 = arith.constant 0.000000e+00 : f32
    %22 = vector.broadcast %cst_20 : f32 to vector<8x128xf32>
    %23 = arith.maximumf %21, %22 : vector<8x128xf32>
    %24 = arith.truncf %23 : vector<8x128xf32> to vector<8x128xbf16>
    %c0_21 = arith.constant 0 : index
    %c0_22 = arith.constant 0 : index
    %25 = vector.load %arg4[%c0_21, %c0_22] : memref<128x128xbf16, #tpu.memory_space<vmem>>, vector<128x128xbf16>
    %cst_23 = arith.constant dense<0.000000e+00> : vector<8x128xf32>
    %26 = tpu.matmul %24, %25, %cst_23 {dimension_numbers = #tpu.dot_dimension_numbers<[1], [0], [0], [1], [0, 0, 1, 1], [], []>} : vector<8x128xbf16>, vector<128x128xbf16>, vector<8x128xf32> -> vector<8x128xf32>
    %c0_24 = arith.constant 0 : index
    %c0_25 = arith.constant 0 : index
    %27 = vector.load %arg5[%c0_24, %c0_25] : memref<1x128xf32, #tpu.memory_space<vmem>>, vector<1x128xf32>
    %28 = vector.broadcast %27 : vector<1x128xf32> to vector<8x128xf32>
    %29 = arith.addf %26, %28 : vector<8x128xf32>
    %c0_26 = arith.constant 0 : index
    %c0_27 = arith.constant 0 : index
    %c0_28 = arith.constant 0 : index
    %30 = vector.load %arg6[%c0_26, %c0_27, %c0_28] : memref<1x8x128xf32, #tpu.memory_space<vmem>>, vector<1x8x128xf32>
    %31 = vector.shape_cast %30 : vector<1x8x128xf32> to vector<8x128xf32>
    %32 = vector.shape_cast %29 : vector<8x128xf32> to vector<1x8x128xf32>
    tpu.vector_store %arg6[%c0_26, %c0_27, %c0_28], %32 {strides = array<i32>} : memref<1x8x128xf32, #tpu.memory_space<vmem>>, vector<1x8x128xf32>,
    return
  }
  func.func @transform_0(%arg0: i32) -> (i32, i32, i32) {
    %c0_i32 = arith.constant 0 : i32
    %c0_i32_0 = arith.constant 0 : i32
    %c0_i32_1 = arith.constant 0 : i32
    return %arg0, %c0_i32, %c0_i32_0 : i32, i32, i32
  }
  func.func @transform_1(%arg0: i32) -> (i32, i32, i32) {
    %c0_i32 = arith.constant 0 : i32
    %c0_i32_0 = arith.constant 0 : i32
    %c0_i32_1 = arith.constant 0 : i32
    %c0_i32_2 = arith.constant 0 : i32
    return %c0_i32, %c0_i32_0, %c0_i32_1 : i32, i32, i32
  }
  func.func @transform_2(%arg0: i32) -> (i32, i32) {
    %c0_i32 = arith.constant 0 : i32
    %c0_i32_0 = arith.constant 0 : i32
    %c0_i32_1 = arith.constant 0 : i32
    return %c0_i32, %c0_i32_0 : i32, i32
  }
  func.func @transform_3(%arg0: i32) -> (i32, i32) {
    %c0_i32 = arith.constant 0 : i32
    %c0_i32_0 = arith.constant 0 : i32
    %c0_i32_1 = arith.constant 0 : i32
    return %c0_i32, %c0_i32_0 : i32, i32
  }
  func.func @transform_4(%arg0: i32) -> (i32, i32) {
    %c0_i32 = arith.constant 0 : i32
    %c0_i32_0 = arith.constant 0 : i32
    %c0_i32_1 = arith.constant 0 : i32
    return %c0_i32, %c0_i32_0 : i32, i32
  }
  func.func @transform_5(%arg0: i32) -> (i32, i32, i32) {
    %c0_i32 = arith.constant 0 : i32
    %c0_i32_0 = arith.constant 0 : i32
    %c0_i32_1 = arith.constant 0 : i32
    return %arg0, %c0_i32, %c0_i32_0 : i32, i32, i32
  }
}

</mosaic_0001>

<llo_original>
// kernel: model_forward.4
$region0: #{model_forward.4}
  #allocation0 [shape = 'u32[]', space=smem, size = 0x4, offset = 0x4, fixed_abs, tag = 'smem constant byte address 0x4 - core index']
  #allocation1 [shape = 'u32[144,128]{1,0:T(1,128)}', space=vmem, size = 0x12000, scoped, tag = 'internal scratch']
  %s0 = inlined_call_operand.vmem [shape: bf16[2,9,108], index: 0, kind: input, shape index: {}]
  %s1 = inlined_call_operand.vmem [shape: bf16[2,108,128], index: 1, kind: input, shape index: {}]
  %s2 = inlined_call_operand.vmem [shape: f32[1,128], index: 2, kind: input, shape index: {}]
  %s3 = inlined_call_operand.vmem [shape: bf16[2,8,128], index: 3, kind: output, shape index: {}]
  %s4 = sld [smem:[#allocation0]]
  $region45: #{model_forward.4} parent=0
    _
  %s6 = ssub.s32 1, %s4
  %s7 = scalar_select 0, %s6, %s4
  loop: start=0, step=1, limit=4
  $region2: #{model_forward.4} parent=0 // loop_pre_header
    _
  $region3: #{model_forward.4} parent=0 // loop_header
    %s9 = sphi 0, %s13
    %p10 = scmp.ge.s32.totalorder %s9, 4
    %s19 = sphi 0, %s21
    %s22 = sphi 0, %s19
    %s23 = sphi 0, %s22
    %s39 = sphi 0, %s23
    %s43 = sphi 0, %s43
    %s45 = sphi 0, %s43
    %s46 = sphi 0, %s45
    %s60 = sphi 0, %s46
    %s64 = sphi 0, %s64
    %s66 = sphi 0, %s64
    %s67 = sphi 0, %s66
    %s81 = sphi 0, %s67
    %s87 = sphi 0, %s89
    %s90 = sphi 0, %s87
    %s91 = sphi 0, %s90
    %s107 = sphi 0, %s91
  $region4: #{model_forward.4} parent=0 // loop_header_branch
    %12 = sbr.rel (%p10) target = $region8
  $region5: #{model_forward.4} parent=0 // loop_body
    %s14 = ssub.s32 %s9, 1
    %s15 = ssub.s32 %s9, 2
    %s16 = sadd.s32 %s9, 1
    %s17 = ssub.s32 %s9, %s16
    %p18 = scmp.eq.s32.totalorder %s17, 0
    %s20 = sadd.s32 %s19, 1
    %s21 = scalar_select %p18, %s19, %s20
    %p24 = pneg %p18
    %p25 = scmp.eq.s32.totalorder %s9, 1
    %p26 = por %p24, %p25
    %p27 = scmp.ne.s32.totalorder %s19, %s22
    %p28 = scmp.eq.s32.totalorder %s9, 0
    %p29 = por %p27, %p28
    %p30 = scmp.ne.s32.totalorder %s19, %s22
    %p31 = scmp.eq.s32.totalorder %s14, 1
    %p32 = por %p30, %p31
    %p33 = scmp.ne.s32.totalorder %s22, %s23
    %p34 = scmp.eq.s32.totalorder %s14, 0
    %p35 = por %p33, %p34
    %p36 = scmp.ne.s32.totalorder %s22, %s23
    %p37 = scmp.eq.s32.totalorder %s15, 1
    %p38 = por %p36, %p37
    %p40 = scmp.ne.s32.totalorder %s23, %s39
    %p41 = scmp.eq.s32.totalorder %s15, 0
    %p42 = por %p40, %p41
    %s44 = sadd.s32 %s43, 1
    %p47 = scmp.eq.s32.totalorder %s9, 1
    %p48 = scmp.ne.s32.totalorder %s43, %s45
    %p49 = scmp.eq.s32.totalorder %s9, 0
    %p50 = por %p48, %p49
    %p51 = scmp.ne.s32.totalorder %s43, %s45
    %p52 = scmp.eq.s32.totalorder %s14, 1
    %p53 = por %p51, %p52
    %p54 = scmp.ne.s32.totalorder %s45, %s46
    %p55 = scmp.eq.s32.totalorder %s14, 0
    %p56 = por %p54, %p55
    %p57 = scmp.ne.s32.totalorder %s45, %s46
    %p58 = scmp.eq.s32.totalorder %s15, 1
    %p59 = por %p57, %p58
    %p61 = scmp.ne.s32.totalorder %s46, %s60
    %p62 = scmp.eq.s32.totalorder %s15, 0
    %p63 = por %p61, %p62
    %s65 = sadd.s32 %s64, 1
    %p68 = scmp.eq.s32.totalorder %s9, 1
    %p69 = scmp.ne.s32.totalorder %s64, %s66
    %p70 = scmp.eq.s32.totalorder %s9, 0
    %p71 = por %p69, %p70
    %p72 = scmp.ne.s32.totalorder %s64, %s66
    %p73 = scmp.eq.s32.totalorder %s14, 1
    %p74 = por %p72, %p73
    %p75 = scmp.ne.s32.totalorder %s66, %s67
    %p76 = scmp.eq.s32.totalorder %s14, 0
    %p77 = por %p75, %p76
    %p78 = scmp.ne.s32.totalorder %s66, %s67
    %p79 = scmp.eq.s32.totalorder %s15, 1
    %p80 = por %p78, %p79
    %p82 = scmp.ne.s32.totalorder %s67, %s81
    %p83 = scmp.eq.s32.totalorder %s15, 0
    %p84 = por %p82, %p83
    %s85 = ssub.s32 %s9, %s16
    %p86 = scmp.eq.s32.totalorder %s85, 0
    %s88 = sadd.s32 %s87, 1
    %s89 = scalar_select %p86, %s87, %s88
    %p92 = pneg %p86
    %p93 = scmp.eq.s32.totalorder %s9, 1
    %p94 = por %p92, %p93
    %p95 = scmp.ne.s32.totalorder %s87, %s90
    %p96 = scmp.eq.s32.totalorder %s9, 0
    %p97 = por %p95, %p96
    %p98 = scmp.ne.s32.totalorder %s87, %s90
    %p99 = scmp.eq.s32.totalorder %s14, 1
    %p100 = por %p98, %p99
    %p101 = scmp.ne.s32.totalorder %s90, %s91
    %p102 = scmp.eq.s32.totalorder %s14, 0
    %p103 = por %p101, %p102
    %p104 = scmp.ne.s32.totalorder %s90, %s91
    %p105 = scmp.eq.s32.totalorder %s15, 1
    %p106 = por %p104, %p105
    %p108 = scmp.ne.s32.totalorder %s91, %s107
    %p109 = scmp.eq.s32.totalorder %s15, 0
    %p110 = por %p108, %p109
    %p111 = scmp.le.s32.totalorder 1, %s9
    %p112 = scmp.lt.s32.totalorder %s9, 3
    %p113 = pnand %p111, %p112
    %p114 = pneg %p113
    // Predicated region
    $region9: #{model_forward.4} parent=5 // pred_check
      _
    $region10: #{model_forward.4} parent=5 // pred_check_branch
      %116 = sbr.rel (%p113) target = $region12
    $region11: #{model_forward.4} parent=5 // pred_region
      %s117 = ssub.s32 %s9, 1
      // Predicated region
      $region13: #{model_forward.4} parent=11 // pred_check
        %p118 = pneg %p56
      $region14: #{model_forward.4} parent=11 // pred_check_branch
        %120 = sbr.rel (%p118) target = $region16
      $region15: #{model_forward.4} parent=11 // pred_region
        _
      $region16: #{model_forward.4} parent=11 // pred_fallthru
        _
      // Predicated region
      $region17: #{model_forward.4} parent=11 // pred_check
        %p121 = pneg %p77
      $region18: #{model_forward.4} parent=11 // pred_check_branch
        %123 = sbr.rel (%p121) target = $region20
      $region19: #{model_forward.4} parent=11 // pred_region
        _
      $region20: #{model_forward.4} parent=11 // pred_fallthru
        _
    $region12: #{model_forward.4} parent=5 // pred_fallthru
      _
    %p124 = scmp.lt.s32.totalorder %s9, 2
    // Predicated region
    $region21: #{model_forward.4} parent=5 // pred_check
      %p125 = pneg %p124
    $region22: #{model_forward.4} parent=5 // pred_check_branch
      %127 = sbr.rel (%p125) target = $region24
    $region23: #{model_forward.4} parent=5 // pred_region
      // Predicated region
      $region25: #{model_forward.4} parent=23 // pred_check
        %p128 = pneg %p29
      $region26: #{model_forward.4} parent=23 // pred_check_branch
        %130 = sbr.rel (%p128) target = $region28
      $region27: #{model_forward.4} parent=23 // pred_region
        %p131 = scmp.lt.s32.totalorder %s9, 1
        %s132 = scalar_select %p131, %s9, 1
        %s133 = smul.addr %s132, 2
        %s134 = smul.addr %s133, 4
        %s135 = scalar_lea.vmem %s0, %s134
      $region28: #{model_forward.4} parent=23 // pred_fallthru
        _
    $region24: #{model_forward.4} parent=5 // pred_fallthru
      _
    %p136 = scmp.le.s32.totalorder 1, %s9
    %p137 = scmp.lt.s32.totalorder %s9, 3
    %p138 = pnand %p136, %p137
    %p139 = pneg %p138
    // Predicated region
    $region29: #{model_forward.4} parent=5 // pred_check
      _
    $region30: #{model_forward.4} parent=5 // pred_check_branch
      %141 = sbr.rel (%p138) target = $region32
    $region31: #{model_forward.4} parent=5 // pred_region
      %s142 = ssub.s32 %s9, 1
      %p143 = scmp.lt.s32.totalorder %s14, 1
      %s144 = scalar_select %p143, %s14, 1
      %s145 = smul.addr %s144, 2
      %s146 = smul.addr %s145, 4
      %s147 = scalar_lea.vmem %s0, %s146
      %p148 = pneg %p35
      %p149 = pneg %p32
      %p150 = pneg %p56
      %p151 = pneg %p53
      %p152 = pneg %p77
      %p153 = pneg %p74
      %p154 = pneg %p103
      %p155 = pneg %p100
      %p156 = scmp.lt.s32.totalorder %s14, 1
      %s157 = scalar_select %p156, %s14, 1
      %s158 = smul.addr %s157, 4
      %s159 = scalar_lea.vmem %s3, %s158
      %p160 = scmp.lt.s32.totalorder %s14, 1
      %s161 = scalar_select %p160, %s14, 1
      %s162 = smul.addr %s161, 2
      %s163 = smul.addr %s162, 4
      %s164 = scalar_lea.vmem %s0, %s163
      %p165 = scmp.lt.s32.totalorder %s14, 1
      %s166 = scalar_select %p165, %s14, 1
      %s167 = smul.addr %s166, 4
      %s168 = scalar_lea.vmem %s3, %s167
      %v170 = vld [vmem:[%s164] sm:$0xf]
      %v171 = vld [vmem:[%s1] sm:$0xf]
      %v172 = vld [vmem:[%s1 + $0x4] sm:$0xf]
      %v173 = vld [vmem:[%s1 + $0x8] sm:$0xf]
      %v174 = vld [vmem:[%s1 + $0xc] sm:$0xf]
      %v175 = vld [vmem:[%s1 + $0x10] sm:$0xf]
      %v176 = vld [vmem:[%s1 + $0x14] sm:$0xf]
      %v177 = vld [vmem:[%s1 + $0x18] sm:$0xf]
      %v178 = vld [vmem:[%s1 + $0x1c] sm:$0xf]
      %v179 = vld [vmem:[%s1 + $0x20] sm:$0xf]
      %v180 = vld [vmem:[%s1 + $0x24] sm:$0xf]
      %v181 = vld [vmem:[%s1 + $0x28] sm:$0xf]
      %v182 = vld [vmem:[%s1 + $0x2c] sm:$0xf]
      %v183 = vld [vmem:[%s1 + $0x30] sm:$0xf]
      %v184 = vld [vmem:[%s1 + $0x34] sm:$0x3]
      %v185 = vld [vmem:[%s164 + $0x4] sm:$0x1]
      %s186 = scalar_lea.vmem %s1, 56
      %v187 = vld [vmem:[%s186] sm:$0xf]
      %v188 = vld [vmem:[%s186 + $0x4] sm:$0xf]
      %v189 = vld [vmem:[%s186 + $0x8] sm:$0xf]
      %v190 = vld [vmem:[%s186 + $0xc] sm:$0xf]
      %v191 = vld [vmem:[%s186 + $0x10] sm:$0xf]
      %v192 = vld [vmem:[%s186 + $0x14] sm:$0xf]
      %v193 = vld [vmem:[%s186 + $0x18] sm:$0xf]
      %v194 = vld [vmem:[%s186 + $0x1c] sm:$0xf]
      %v195 = vld [vmem:[%s186 + $0x20] sm:$0xf]
      %v196 = vld [vmem:[%s186 + $0x24] sm:$0xf]
      %v197 = vld [vmem:[%s186 + $0x28] sm:$0xf]
      %v198 = vld [vmem:[%s186 + $0x2c] sm:$0xf]
      %v199 = vld [vmem:[%s186 + $0x30] sm:$0xf]
      %v200 = vld [vmem:[%s186 + $0x34] sm:$0x3]
      %v203 = vunpack.c.l.b16 %v170
      %v204 = vunpack.c.l.b16 %v185
      %v205 = vpack.c.b16 %v204, %v203
      %v207 = vshrl.u32 %v205, 16
      %v209 = vshll.u32 %v205, 16
      %v211 = vrot.slane %v209, 1
      %v212 = vor.u32 %v207, %v211
      %v227 = vunpack.c.l.b16 %v187
      %v228 = vunpack.c.l.b16 %v188
      %v229 = vunpack.c.l.b16 %v189
      %v230 = vunpack.c.l.b16 %v190
      %v231 = vunpack.c.l.b16 %v191
      %v232 = vunpack.c.l.b16 %v192
      %v233 = vunpack.c.l.b16 %v193
      %v234 = vunpack.c.l.b16 %v194
      %v235 = vunpack.c.l.b16 %v195
      %v236 = vunpack.c.l.b16 %v196
      %v237 = vunpack.c.l.b16 %v197
      %v238 = vunpack.c.l.b16 %v198
      %v239 = vunpack.c.l.b16 %v199
      %v240 = vunpack.c.l.b16 %v200
      %v241 = vpack.c.b16 %v228, %v227
      %v242 = vpack.c.b16 %v230, %v229
      %v243 = vpack.c.b16 %v232, %v231
      %v244 = vpack.c.b16 %v234, %v233
      %v245 = vpack.c.b16 %v236, %v235
      %v246 = vpack.c.b16 %v238, %v237
      %v247 = vpack.c.b16 %v240, %v239
      %vm254 = vcmask 883712
      %v256 = vsel %vm254, %v212, 0
      %vm258 = vcmask 1045504
      %v260 = vsel %vm258, %v247, 0
      %262 = vmatprep.subr.bf16.mxu0 0
      %263 = vmatpush1.bf16.msra.mxu0 %v241
      %264 = vmatprep.subr.bf16.mxu0 0
      %265 = vmatpush1.bf16.msra.mxu0 %v242
      %266 = vmatprep.subr.bf16.mxu0 0
      %267 = vmatpush1.bf16.msra.mxu0 %v243
      %268 = vmatprep.subr.bf16.mxu0 0
      %269 = vmatpush1.bf16.msra.mxu0 %v244
      %270 = vmatprep.subr.bf16.mxu0 0
      %271 = vmatpush1.bf16.msra.mxu0 %v245
      %272 = vmatprep.subr.bf16.mxu0 0
      %273 = vmatpush1.bf16.msra.mxu0 %v246
      %274 = vmatprep.subr.bf16.mxu0 0
      %275 = vmatpush1.bf16.msra.mxu0 %v260
      %276 = vmatprep.subr.bf16.mxu0 0
      %277 = vmatpush1.bf16.msra.mxu0 0
      %278 = vmatprep.subr.bf16.mxu0 0
      %279 = vmatpush1.bf16.msra.mxu0 0
      %280 = vmatprep.subr.bf16.mxu0 0
      %281 = vmatpush1.bf16.msra.mxu0 0
      %282 = vmatprep.subr.bf16.mxu0 0
      %283 = vmatpush1.bf16.msra.mxu0 0
      %284 = vmatprep.subr.bf16.mxu0 0
      %285 = vmatpush1.bf16.msra.mxu0 0
      %286 = vmatprep.subr.bf16.mxu0 0
      %287 = vmatpush1.bf16.msra.mxu0 0
      %288 = vmatprep.subr.bf16.mxu0 0
      %289 = vmatpush1.bf16.msra.mxu0 0
      %290 = vmatprep.subr.bf16.mxu0 0
      %291 = vmatpush1.bf16.msra.mxu0 0
      %292 = vmatprep.subr.bf16.mxu0 0
      %293 = vmatpush1.bf16.msra.mxu0 0
      %294 = vmatprep.mubr.bf16.mxu0 0
      %295 = vmatmul.mubr.bf16.gmra.mrb[0].mxu0 %v256
      %v296 = vpop.f32.mrb[0].mxu0
      %v297 = vadd.f32 0.0, %v296
      %v298 = vpop.f32.mrb[0].mxu0
      %v299 = vpop.f32.mrb[0].mxu0
      %v300 = vpop.f32.mrb[0].mxu0
      %301 = vdwg.mxu0
      %v316 = vunpack.c.l.b16 %v171
      %v317 = vunpack.c.l.b16 %v172
      %v318 = vunpack.c.l.b16 %v173
      %v319 = vunpack.c.l.b16 %v174
      %v320 = vunpack.c.l.b16 %v175
      %v321 = vunpack.c.l.b16 %v176
      %v322 = vunpack.c.l.b16 %v177
      %v323 = vunpack.c.l.b16 %v178
      %v324 = vunpack.c.l.b16 %v179
      %v325 = vunpack.c.l.b16 %v180
      %v326 = vunpack.c.l.b16 %v181
      %v327 = vunpack.c.l.b16 %v182
      %v328 = vunpack.c.l.b16 %v183
      %v329 = vunpack.c.l.b16 %v184
      %v330 = vpack.c.b16 %v317, %v316
      %v331 = vpack.c.b16 %v319, %v318
      %v332 = vpack.c.b16 %v321, %v320
      %v333 = vpack.c.b16 %v323, %v322
      %v334 = vpack.c.b16 %v325, %v324
      %v335 = vpack.c.b16 %v327, %v326
      %v336 = vpack.c.b16 %v329, %v328
      %v344 = vsel %vm254, %v170, 0
      %v347 = vsel %vm258, %v336, 0
      %349 = vmatprep.subr.bf16.mxu0 0
      %350 = vmatpush1.bf16.msra.mxu0 %v330
      %351 = vmatprep.subr.bf16.mxu0 0
      %352 = vmatpush1.bf16.msra.mxu0 %v331
      %353 = vmatprep.subr.bf16.mxu0 0
      %354 = vmatpush1.bf16.msra.mxu0 %v332
      %355 = vmatprep.subr.bf16.mxu0 0
      %356 = vmatpush1.bf16.msra.mxu0 %v333
      %357 = vmatprep.subr.bf16.mxu0 0
      %358 = vmatpush1.bf16.msra.mxu0 %v334
      %359 = vmatprep.subr.bf16.mxu0 0
      %360 = vmatpush1.bf16.msra.mxu0 %v335
      %361 = vmatprep.subr.bf16.mxu0 0
      %362 = vmatpush1.bf16.msra.mxu0 %v347
      %363 = vmatprep.subr.bf16.mxu0 0
      %364 = vmatpush1.bf16.msra.mxu0 0
      %365 = vmatprep.subr.bf16.mxu0 0
      %366 = vmatpush1.bf16.msra.mxu0 0
      %367 = vmatprep.subr.bf16.mxu0 0
      %368 = vmatpush1.bf16.msra.mxu0 0
      %369 = vmatprep.subr.bf16.mxu0 0
      %370 = vmatpush1.bf16.msra.mxu0 0
      %371 = vmatprep.subr.bf16.mxu0 0
      %372 = vmatpush1.bf16.msra.mxu0 0
      %373 = vmatprep.subr.bf16.mxu0 0
      %374 = vmatpush1.bf16.msra.mxu0 0
      %375 = vmatprep.subr.bf16.mxu0 0
      %376 = vmatpush1.bf16.msra.mxu0 0
      %377 = vmatprep.subr.bf16.mxu0 0
      %378 = vmatpush1.bf16.msra.mxu0 0
      %379 = vmatprep.subr.bf16.mxu0 0
      %380 = vmatpush1.bf16.msra.mxu0 0
      %381 = vmatprep.mubr.bf16.mxu0 0
      %382 = vmatmul.mubr.bf16.gmra.mrb[0].mxu0 %v344
      %v383 = vpop.f32.mrb[0].mxu0
      %v384 = vadd.f32 %v297, %v383
      %v385 = vpop.f32.mrb[0].mxu0
      %v386 = vpop.f32.mrb[0].mxu0
      %v387 = vpop.f32.mrb[0].mxu0
      %388 = vdwg.mxu0
      %v389 = vld [vmem:[%s2] sm:$0x1]
      %v391 = vlaneseq
      %v392 = vshrl.u32 %v391, 7
      %v393 = vsub.s32 0, %v392
      %v394 = vrot.slane %v389, %v393
      %v396 = vadd.f32 %v384, %v394
      %v397 = vmax.f32 %v396, 0.0
      %v398 = vpack.c.bf16 %v397, %v397
      %399 = vst [vmem:[%s168] sm:$0xf] %v398
      %p400 = scmp.lt.s32.totalorder %s14, 1
      %s401 = scalar_select %p400, %s14, 1
      %s402 = smul.addr %s401, 4
      %s403 = scalar_lea.vmem %s3, %s402
      // Predicated region
      $region33: #{model_forward.4} parent=31 // pred_check
        %p404 = pneg %p100
      $region34: #{model_forward.4} parent=31 // pred_check_branch
        %406 = sbr.rel (%p404) target = $region36
      $region35: #{model_forward.4} parent=31 // pred_region
        _
      $region36: #{model_forward.4} parent=31 // pred_fallthru
        _
    $region32: #{model_forward.4} parent=5 // pred_fallthru
      _
    %p407 = scmp.le.s32.totalorder 2, %s9
    // Predicated region
    $region37: #{model_forward.4} parent=5 // pred_check
      %p408 = pneg %p407
    $region38: #{model_forward.4} parent=5 // pred_check_branch
      %410 = sbr.rel (%p408) target = $region40
    $region39: #{model_forward.4} parent=5 // pred_region
      %s411 = ssub.s32 %s9, 2
      // Predicated region
      $region41: #{model_forward.4} parent=39 // pred_check
        %p412 = pneg %p106
      $region42: #{model_forward.4} parent=39 // pred_check_branch
        %414 = sbr.rel (%p412) target = $region44
      $region43: #{model_forward.4} parent=39 // pred_region
        %p415 = scmp.lt.s32.totalorder %s15, 1
        %s416 = scalar_select %p415, %s15, 1
        %s417 = smul.addr %s416, 4
        %s418 = scalar_lea.vmem %s3, %s417
      $region44: #{model_forward.4} parent=39 // pred_fallthru
        _
    $region40: #{model_forward.4} parent=5 // pred_fallthru
      _
  $region6: #{model_forward.4} parent=0 // loop_footer
    %s13 = sadd.s32 1, %s9
  $region7: #{model_forward.4} parent=0 // loop_footer_branch
    %8 = sbr.rel target = $region3
  $region8: #{model_forward.4} parent=0 // loop_exit
    _

// kernel: model_forward.6
$region0: #{model_forward.6}
  #allocation0 [shape = 'u32[]', space=smem, size = 0x4, offset = 0x4, fixed_abs, tag = 'smem constant byte address 0x4 - core index']
  #allocation1 [shape = 'u32[144,128]{1,0:T(1,128)}', space=vmem, size = 0x12000, scoped, tag = 'internal scratch']
  %s0 = inlined_call_operand.vmem [shape: bf16[2,4,256], index: 0, kind: input, shape index: {}]
  %s1 = inlined_call_operand.vmem [shape: bf16[2,4,128], index: 1, kind: input, shape index: {}]
  %s2 = inlined_call_operand.vmem [shape: bf16[256,256], index: 2, kind: input, shape index: {}]
  %s3 = inlined_call_operand.vmem [shape: bf16[128,256], index: 3, kind: input, shape index: {}]
  %s4 = inlined_call_operand.vmem [shape: f32[1,256], index: 4, kind: input, shape index: {}]
  %s5 = inlined_call_operand.vmem [shape: bf16[2,4,256], index: 5, kind: output, shape index: {}]
  %s6 = sld [smem:[#allocation0]]
  $region53: #{model_forward.6} parent=0
    _
  %s8 = ssub.s32 1, %s6
  %s9 = scalar_select 0, %s8, %s6
  loop: start=0, step=1, limit=4
  $region2: #{model_forward.6} parent=0 // loop_pre_header
    _
  $region3: #{model_forward.6} parent=0 // loop_header
    %s11 = sphi 0, %s15
    %p12 = scmp.ge.s32.totalorder %s11, 4
    %s21 = sphi 0, %s23
    %s24 = sphi 0, %s21
    %s25 = sphi 0, %s24
    %s41 = sphi 0, %s25
    %s47 = sphi 0, %s49
    %s50 = sphi 0, %s47
    %s51 = sphi 0, %s50
    %s67 = sphi 0, %s51
    %s71 = sphi 0, %s71
    %s73 = sphi 0, %s71
    %s74 = sphi 0, %s73
    %s88 = sphi 0, %s74
    %s92 = sphi 0, %s92
    %s94 = sphi 0, %s92
    %s95 = sphi 0, %s94
    %s109 = sphi 0, %s95
    %s113 = sphi 0, %s113
    %s115 = sphi 0, %s113
    %s116 = sphi 0, %s115
    %s130 = sphi 0, %s116
    %s136 = sphi 0, %s138
    %s139 = sphi 0, %s136
    %s140 = sphi 0, %s139
    %s156 = sphi 0, %s140
  $region4: #{model_forward.6} parent=0 // loop_header_branch
    %14 = sbr.rel (%p12) target = $region8
  $region5: #{model_forward.6} parent=0 // loop_body
    %s16 = ssub.s32 %s11, 1
    %s17 = ssub.s32 %s11, 2
    %s18 = sadd.s32 %s11, 1
    %s19 = ssub.s32 %s11, %s18
    %p20 = scmp.eq.s32.totalorder %s19, 0
    %s22 = sadd.s32 %s21, 1
    %s23 = scalar_select %p20, %s21, %s22
    %p26 = pneg %p20
    %p27 = scmp.eq.s32.totalorder %s11, 1
    %p28 = por %p26, %p27
    %p29 = scmp.ne.s32.totalorder %s21, %s24
    %p30 = scmp.eq.s32.totalorder %s11, 0
    %p31 = por %p29, %p30
    %p32 = scmp.ne.s32.totalorder %s21, %s24
    %p33 = scmp.eq.s32.totalorder %s16, 1
    %p34 = por %p32, %p33
    %p35 = scmp.ne.s32.totalorder %s24, %s25
    %p36 = scmp.eq.s32.totalorder %s16, 0
    %p37 = por %p35, %p36
    %p38 = scmp.ne.s32.totalorder %s24, %s25
    %p39 = scmp.eq.s32.totalorder %s17, 1
    %p40 = por %p38, %p39
    %p42 = scmp.ne.s32.totalorder %s25, %s41
    %p43 = scmp.eq.s32.totalorder %s17, 0
    %p44 = por %p42, %p43
    %s45 = ssub.s32 %s11, %s18
    %p46 = scmp.eq.s32.totalorder %s45, 0
    %s48 = sadd.s32 %s47, 1
    %s49 = scalar_select %p46, %s47, %s48
    %p52 = pneg %p46
    %p53 = scmp.eq.s32.totalorder %s11, 1
    %p54 = por %p52, %p53
    %p55 = scmp.ne.s32.totalorder %s47, %s50
    %p56 = scmp.eq.s32.totalorder %s11, 0
    %p57 = por %p55, %p56
    %p58 = scmp.ne.s32.totalorder %s47, %s50
    %p59 = scmp.eq.s32.totalorder %s16, 1
    %p60 = por %p58, %p59
    %p61 = scmp.ne.s32.totalorder %s50, %s51
    %p62 = scmp.eq.s32.totalorder %s16, 0
    %p63 = por %p61, %p62
    %p64 = scmp.ne.s32.totalorder %s50, %s51
    %p65 = scmp.eq.s32.totalorder %s17, 1
    %p66 = por %p64, %p65
    %p68 = scmp.ne.s32.totalorder %s51, %s67
    %p69 = scmp.eq.s32.totalorder %s17, 0
    %p70 = por %p68, %p69
    %s72 = sadd.s32 %s71, 1
    %p75 = scmp.eq.s32.totalorder %s11, 1
    %p76 = scmp.ne.s32.totalorder %s71, %s73
    %p77 = scmp.eq.s32.totalorder %s11, 0
    %p78 = por %p76, %p77
    %p79 = scmp.ne.s32.totalorder %s71, %s73
    %p80 = scmp.eq.s32.totalorder %s16, 1
    %p81 = por %p79, %p80
    %p82 = scmp.ne.s32.totalorder %s73, %s74
    %p83 = scmp.eq.s32.totalorder %s16, 0
    %p84 = por %p82, %p83
    %p85 = scmp.ne.s32.totalorder %s73, %s74
    %p86 = scmp.eq.s32.totalorder %s17, 1
    %p87 = por %p85, %p86
    %p89 = scmp.ne.s32.totalorder %s74, %s88
    %p90 = scmp.eq.s32.totalorder %s17, 0
    %p91 = por %p89, %p90
    %s93 = sadd.s32 %s92, 1
    %p96 = scmp.eq.s32.totalorder %s11, 1
    %p97 = scmp.ne.s32.totalorder %s92, %s94
    %p98 = scmp.eq.s32.totalorder %s11, 0
    %p99 = por %p97, %p98
    %p100 = scmp.ne.s32.totalorder %s92, %s94
    %p101 = scmp.eq.s32.totalorder %s16, 1
    %p102 = por %p100, %p101
    %p103 = scmp.ne.s32.totalorder %s94, %s95
    %p104 = scmp.eq.s32.totalorder %s16, 0
    %p105 = por %p103, %p104
    %p106 = scmp.ne.s32.totalorder %s94, %s95
    %p107 = scmp.eq.s32.totalorder %s17, 1
    %p108 = por %p106, %p107
    %p110 = scmp.ne.s32.totalorder %s95, %s109
    %p111 = scmp.eq.s32.totalorder %s17, 0
    %p112 = por %p110, %p111
    %s114 = sadd.s32 %s113, 1
    %p117 = scmp.eq.s32.totalorder %s11, 1
    %p118 = scmp.ne.s32.totalorder %s113, %s115
    %p119 = scmp.eq.s32.totalorder %s11, 0
    %p120 = por %p118, %p119
    %p121 = scmp.ne.s32.totalorder %s113, %s115
    %p122 = scmp.eq.s32.totalorder %s16, 1
    %p123 = por %p121, %p122
    %p124 = scmp.ne.s32.totalorder %s115, %s116
    %p125 = scmp.eq.s32.totalorder %s16, 0
    %p126 = por %p124, %p125
    %p127 = scmp.ne.s32.totalorder %s115, %s116
    %p128 = scmp.eq.s32.totalorder %s17, 1
    %p129 = por %p127, %p128
    %p131 = scmp.ne.s32.totalorder %s116, %s130
    %p132 = scmp.eq.s32.totalorder %s17, 0
    %p133 = por %p131, %p132
    %s134 = ssub.s32 %s11, %s18
    %p135 = scmp.eq.s32.totalorder %s134, 0
    %s137 = sadd.s32 %s136, 1
    %s138 = scalar_select %p135, %s136, %s137
    %p141 = pneg %p135
    %p142 = scmp.eq.s32.totalorder %s11, 1
    %p143 = por %p141, %p142
    %p144 = scmp.ne.s32.totalorder %s136, %s139
    %p145 = scmp.eq.s32.totalorder %s11, 0
    %p146 = por %p144, %p145
    %p147 = scmp.ne.s32.totalorder %s136, %s139
    %p148 = scmp.eq.s32.totalorder %s16, 1
    %p149 = por %p147, %p148
    %p150 = scmp.ne.s32.totalorder %s139, %s140
    %p151 = scmp.eq.s32.totalorder %s16, 0
    %p152 = por %p150, %p151
    %p153 = scmp.ne.s32.totalorder %s139, %s140
    %p154 = scmp.eq.s32.totalorder %s17, 1
    %p155 = por %p153, %p154
    %p157 = scmp.ne.s32.totalorder %s140, %s156
    %p158 = scmp.eq.s32.totalorder %s17, 0
    %p159 = por %p157, %p158
    %p160 = scmp.le.s32.totalorder 1, %s11
    %p161 = scmp.lt.s32.totalorder %s11, 3
    %p162 = pnand %p160, %p161
    %p163 = pneg %p162
    // Predicated region
    $region9: #{model_forward.6} parent=5 // pred_check
      _
    $region10: #{model_forward.6} parent=5 // pred_check_branch
      %165 = sbr.rel (%p162) target = $region12
    $region11: #{model_forward.6} parent=5 // pred_region
      %s166 = ssub.s32 %s11, 1
      // Predicated region
      $region13: #{model_forward.6} parent=11 // pred_check
        %p167 = pneg %p84
      $region14: #{model_forward.6} parent=11 // pred_check_branch
        %169 = sbr.rel (%p167) target = $region16
      $region15: #{model_forward.6} parent=11 // pred_region
        _
      $region16: #{model_forward.6} parent=11 // pred_fallthru
        _
      // Predicated region
      $region17: #{model_forward.6} parent=11 // pred_check
        %p170 = pneg %p105
      $region18: #{model_forward.6} parent=11 // pred_check_branch
        %172 = sbr.rel (%p170) target = $region20
      $region19: #{model_forward.6} parent=11 // pred_region
        _
      $region20: #{model_forward.6} parent=11 // pred_fallthru
        _
      // Predicated region
      $region21: #{model_forward.6} parent=11 // pred_check
        %p173 = pneg %p126
      $region22: #{model_forward.6} parent=11 // pred_check_branch
        %175 = sbr.rel (%p173) target = $region24
      $region23: #{model_forward.6} parent=11 // pred_region
        _
      $region24: #{model_forward.6} parent=11 // pred_fallthru
        _
    $region12: #{model_forward.6} parent=5 // pred_fallthru
      _
    %p176 = scmp.lt.s32.totalorder %s11, 2
    // Predicated region
    $region25: #{model_forward.6} parent=5 // pred_check
      %p177 = pneg %p176
    $region26: #{model_forward.6} parent=5 // pred_check_branch
      %179 = sbr.rel (%p177) target = $region28
    $region27: #{model_forward.6} parent=5 // pred_region
      // Predicated region
      $region29: #{model_forward.6} parent=27 // pred_check
        %p180 = pneg %p31
      $region30: #{model_forward.6} parent=27 // pred_check_branch
        %182 = sbr.rel (%p180) target = $region32
      $region31: #{model_forward.6} parent=27 // pred_region
        %p183 = scmp.lt.s32.totalorder %s11, 1
        %s184 = scalar_select %p183, %s11, 1
        %s185 = smul.addr %s184, 2
        %s186 = smul.addr %s185, 2
        %s187 = scalar_lea.vmem %s0, %s186
      $region32: #{model_forward.6} parent=27 // pred_fallthru
        _
      // Predicated region
      $region33: #{model_forward.6} parent=27 // pred_check
        %p188 = pneg %p57
      $region34: #{model_forward.6} parent=27 // pred_check_branch
        %190 = sbr.rel (%p188) target = $region36
      $region35: #{model_forward.6} parent=27 // pred_region
        %p191 = scmp.lt.s32.totalorder %s11, 1
        %s192 = scalar_select %p191, %s11, 1
        %s193 = smul.addr %s192, 2
        %s194 = scalar_lea.vmem %s1, %s193
      $region36: #{model_forward.6} parent=27 // pred_fallthru
        _
    $region28: #{model_forward.6} parent=5 // pred_fallthru
      _
    %p195 = scmp.le.s32.totalorder 1, %s11
    %p196 = scmp.lt.s32.totalorder %s11, 3
    %p197 = pnand %p195, %p196
    %p198 = pneg %p197
    // Predicated region
    $region37: #{model_forward.6} parent=5 // pred_check
      _
    $region38: #{model_forward.6} parent=5 // pred_check_branch
      %200 = sbr.rel (%p197) target = $region40
    $region39: #{model_forward.6} parent=5 // pred_region
      %s201 = ssub.s32 %s11, 1
      %p202 = scmp.lt.s32.totalorder %s16, 1
      %s203 = scalar_select %p202, %s16, 1
      %s204 = smul.addr %s203, 2
      %s205 = smul.addr %s204, 2
      %s206 = scalar_lea.vmem %s0, %s205
      %p207 = pneg %p37
      %p208 = pneg %p34
      %p209 = scmp.lt.s32.totalorder %s16, 1
      %s210 = scalar_select %p209, %s16, 1
      %s211 = smul.addr %s210, 2
      %s212 = scalar_lea.vmem %s1, %s211
      %p213 = pneg %p63
      %p214 = pneg %p60
      %p215 = pneg %p84
      %p216 = pneg %p81
      %p217 = pneg %p105
      %p218 = pneg %p102
      %p219 = pneg %p126
      %p220 = pneg %p123
      %p221 = pneg %p152
      %p222 = pneg %p149
      %p223 = scmp.lt.s32.totalorder %s16, 1
      %s224 = scalar_select %p223, %s16, 1
      %s225 = smul.addr %s224, 2
      %s226 = smul.addr %s225, 2
      %s227 = scalar_lea.vmem %s5, %s226
      %p228 = scmp.lt.s32.totalorder %s16, 1
      %s229 = scalar_select %p228, %s16, 1
      %s230 = smul.addr %s229, 2
      %s231 = smul.addr %s230, 2
      %s232 = scalar_lea.vmem %s0, %s231
      %p233 = scmp.lt.s32.totalorder %s16, 1
      %s234 = scalar_select %p233, %s16, 1
      %s235 = smul.addr %s234, 2
      %s236 = scalar_lea.vmem %s1, %s235
      %p237 = scmp.lt.s32.totalorder %s16, 1
      %s238 = scalar_select %p237, %s16, 1
      %s239 = smul.addr %s238, 2
      %s240 = smul.addr %s239, 2
      %s241 = scalar_lea.vmem %s5, %s240
      %v243 = vld [vmem:[%s232] sm:$0xf]
      %v244 = vld [vmem:[%s2] sm:$0xff]
      %v245 = vld [vmem:[%s2 + $0x8] sm:$0xff]
      %v246 = vld [vmem:[%s2 + $0x10] sm:$0xff]
      %v247 = vld [vmem:[%s2 + $0x18] sm:$0xff]
      %v248 = vld [vmem:[%s2 + $0x20] sm:$0xff]
      %v249 = vld [vmem:[%s2 + $0x28] sm:$0xff]
      %v250 = vld [vmem:[%s2 + $0x30] sm:$0xff]
      %v251 = vld [vmem:[%s2 + $0x38] sm:$0xff]
      %v252 = vld [vmem:[%s2 + $0x40] sm:$0xff]
      %v253 = vld [vmem:[%s2 + $0x48] sm:$0xff]
      %v254 = vld [vmem:[%s2 + $0x50] sm:$0xff]
      %v255 = vld [vmem:[%s2 + $0x58] sm:$0xff]
      %v256 = vld [vmem:[%s2 + $0x60] sm:$0xff]
      %v257 = vld [vmem:[%s2 + $0x68] sm:$0xff]
      %v258 = vld [vmem:[%s2 + $0x70] sm:$0xff]
      %v259 = vld [vmem:[%s2 + $0x78] sm:$0xff]
      %v260 = vld [vmem:[%s2 + $0x80] sm:$0xff]
      %v261 = vld [vmem:[%s2 + $0x88] sm:$0xff]
      %v262 = vld [vmem:[%s2 + $0x90] sm:$0xff]
      %v263 = vld [vmem:[%s2 + $0x98] sm:$0xff]
      %v264 = vld [vmem:[%s2 + $0xa0] sm:$0xff]
      %v265 = vld [vmem:[%s2 + $0xa8] sm:$0xff]
      %v266 = vld [vmem:[%s2 + $0xb0] sm:$0xff]
      %v267 = vld [vmem:[%s2 + $0xb8] sm:$0xff]
      %v268 = vld [vmem:[%s2 + $0xc0] sm:$0xff]
      %v269 = vld [vmem:[%s2 + $0xc8] sm:$0xff]
      %v270 = vld [vmem:[%s2 + $0xd0] sm:$0xff]
      %v271 = vld [vmem:[%s2 + $0xd8] sm:$0xff]
      %v272 = vld [vmem:[%s2 + $0xe0] sm:$0xff]
      %v273 = vld [vmem:[%s2 + $0xe8] sm:$0xff]
      %v274 = vld [vmem:[%s2 + $0xf0] sm:$0xff]
      %v275 = vld [vmem:[%s2 + $0xf8] sm:$0xff]
      %v276 = vld [vmem:[%s236] sm:$0x3]
      %v277 = vld [vmem:[%s3] sm:$0xff]
      %v278 = vld [vmem:[%s3 + $0x8] sm:$0xff]
      %v279 = vld [vmem:[%s3 + $0x10] sm:$0xff]
      %v280 = vld [vmem:[%s3 + $0x18] sm:$0xff]
      %v281 = vld [vmem:[%s3 + $0x20] sm:$0xff]
      %v282 = vld [vmem:[%s3 + $0x28] sm:$0xff]
      %v283 = vld [vmem:[%s3 + $0x30] sm:$0xff]
      %v284 = vld [vmem:[%s3 + $0x38] sm:$0xff]
      %v285 = vld [vmem:[%s3 + $0x40] sm:$0xff]
      %v286 = vld [vmem:[%s3 + $0x48] sm:$0xff]
      %v287 = vld [vmem:[%s3 + $0x50] sm:$0xff]
      %v288 = vld [vmem:[%s3 + $0x58] sm:$0xff]
      %v289 = vld [vmem:[%s3 + $0x60] sm:$0xff]
      %v290 = vld [vmem:[%s3 + $0x68] sm:$0xff]
      %v291 = vld [vmem:[%s3 + $0x70] sm:$0xff]
      %v292 = vld [vmem:[%s3 + $0x78] sm:$0xff]
      %v309 = vunpack.c.l.b16 %v277
      %v310 = vunpack.c.h.b16 %v277
      %v311 = vunpack.c.l.b16 %v278
      %v312 = vunpack.c.h.b16 %v278
      %v313 = vunpack.c.l.b16 %v279
      %v314 = vunpack.c.h.b16 %v279
      %v315 = vunpack.c.l.b16 %v280
      %v316 = vunpack.c.h.b16 %v280
      %v317 = vunpack.c.l.b16 %v281
      %v318 = vunpack.c.h.b16 %v281
      %v319 = vunpack.c.l.b16 %v282
      %v320 = vunpack.c.h.b16 %v282
      %v321 = vunpack.c.l.b16 %v283
      %v322 = vunpack.c.h.b16 %v283
      %v323 = vunpack.c.l.b16 %v284
      %v324 = vunpack.c.h.b16 %v284
      %v325 = vunpack.c.l.b16 %v285
      %v326 = vunpack.c.h.b16 %v285
      %v327 = vunpack.c.l.b16 %v286
      %v328 = vunpack.c.h.b16 %v286
      %v329 = vunpack.c.l.b16 %v287
      %v330 = vunpack.c.h.b16 %v287
      %v331 = vunpack.c.l.b16 %v288
      %v332 = vunpack.c.h.b16 %v288
      %v333 = vunpack.c.l.b16 %v289
      %v334 = vunpack.c.h.b16 %v289
      %v335 = vunpack.c.l.b16 %v290
      %v336 = vunpack.c.h.b16 %v290
      %v337 = vunpack.c.l.b16 %v291
      %v338 = vunpack.c.h.b16 %v291
      %v339 = vunpack.c.l.b16 %v292
      %v340 = vunpack.c.h.b16 %v292
      %v341 = vpack.c.b16 %v311, %v309
      %v342 = vpack.c.b16 %v312, %v310
      %v343 = vpack.c.b16 %v315, %v313
      %v344 = vpack.c.b16 %v316, %v314
      %v345 = vpack.c.b16 %v319, %v317
      %v346 = vpack.c.b16 %v320, %v318
      %v347 = vpack.c.b16 %v323, %v321
      %v348 = vpack.c.b16 %v324, %v322
      %v349 = vpack.c.b16 %v327, %v325
      %v350 = vpack.c.b16 %v328, %v326
      %v351 = vpack.c.b16 %v331, %v329
      %v352 = vpack.c.b16 %v332, %v330
      %v353 = vpack.c.b16 %v335, %v333
      %v354 = vpack.c.b16 %v336, %v334
      %v355 = vpack.c.b16 %v339, %v337
      %v356 = vpack.c.b16 %v340, %v338
      %373 = vmatprep.subr.bf16.mxu0 %v342
      %374 = vmatpush1.bf16.msra.mxu0 %v341
      %375 = vmatprep.subr.bf16.mxu0 %v344
      %376 = vmatpush1.bf16.msra.mxu0 %v343
      %377 = vmatprep.subr.bf16.mxu0 %v346
      %378 = vmatpush1.bf16.msra.mxu0 %v345
      %379 = vmatprep.subr.bf16.mxu0 %v348
      %380 = vmatpush1.bf16.msra.mxu0 %v347
      %381 = vmatprep.subr.bf16.mxu0 %v350
      %382 = vmatpush1.bf16.msra.mxu0 %v349
      %383 = vmatprep.subr.bf16.mxu0 %v352
      %384 = vmatpush1.bf16.msra.mxu0 %v351
      %385 = vmatprep.subr.bf16.mxu0 %v354
      %386 = vmatpush1.bf16.msra.mxu0 %v353
      %387 = vmatprep.subr.bf16.mxu0 %v356
      %388 = vmatpush1.bf16.msra.mxu0 %v355
      %389 = vmatprep.subr.bf16.mxu0 0
      %390 = vmatpush1.bf16.msra.mxu0 0
      %391 = vmatprep.subr.bf16.mxu0 0
      %392 = vmatpush1.bf16.msra.mxu0 0
      %393 = vmatprep.subr.bf16.mxu0 0
      %394 = vmatpush1.bf16.msra.mxu0 0
      %395 = vmatprep.subr.bf16.mxu0 0
      %396 = vmatpush1.bf16.msra.mxu0 0
      %397 = vmatprep.subr.bf16.mxu0 0
      %398 = vmatpush1.bf16.msra.mxu0 0
      %399 = vmatprep.subr.bf16.mxu0 0
      %400 = vmatpush1.bf16.msra.mxu0 0
      %401 = vmatprep.subr.bf16.mxu0 0
      %402 = vmatpush1.bf16.msra.mxu0 0
      %403 = vmatprep.subr.bf16.mxu0 0
      %404 = vmatpush1.bf16.msra.mxu0 0
      %405 = vmatprep.mubr.bf16.mxu0 0
      %406 = vmatmul.mubr.bf16.gmra.mrb[0].mxu0 %v276
      %v407 = vpop.f32.mrb[0].mxu0
      %v408 = vadd.f32 0.0, %v407
      %v409 = vpop.f32.mrb[0].mxu0
      %v410 = vadd.f32 0.0, %v409
      %v411 = vpop.f32.mrb[0].mxu0
      %v412 = vpop.f32.mrb[0].mxu0
      %413 = vdwg.mxu0
      %v416 = vunpack.c.l.s4 1983009808
      %v417 = vunpack.c.0.s8 %v416
      %v418 = vlaneseq
      %v419 = vshrl.u32 %v418, 7
      %v420 = vsub.s32 %v417, %v419
      %v421 = vrot.slane %v243, %v420
      %v422 = vcombine.high %v421, %v421
      %v457 = vunpack.c.l.b16 %v244
      %v458 = vunpack.c.h.b16 %v244
      %v459 = vunpack.c.l.b16 %v245
      %v460 = vunpack.c.h.b16 %v245
      %v461 = vunpack.c.l.b16 %v246
      %v462 = vunpack.c.h.b16 %v246
      %v463 = vunpack.c.l.b16 %v247
      %v464 = vunpack.c.h.b16 %v247
      %v465 = vunpack.c.l.b16 %v248
      %v466 = vunpack.c.h.b16 %v248
      %v467 = vunpack.c.l.b16 %v249
      %v468 = vunpack.c.h.b16 %v249
      %v469 = vunpack.c.l.b16 %v250
      %v470 = vunpack.c.h.b16 %v250
      %v471 = vunpack.c.l.b16 %v251
      %v472 = vunpack.c.h.b16 %v251
      %v473 = vunpack.c.l.b16 %v252
      %v474 = vunpack.c.h.b16 %v252
      %v475 = vunpack.c.l.b16 %v253
      %v476 = vunpack.c.h.b16 %v253
      %v477 = vunpack.c.l.b16 %v254
      %v478 = vunpack.c.h.b16 %v254
      %v479 = vunpack.c.l.b16 %v255
      %v480 = vunpack.c.h.b16 %v255
      %v481 = vunpack.c.l.b16 %v256
      %v482 = vunpack.c.h.b16 %v256
      %v483 = vunpack.c.l.b16 %v257
      %v484 = vunpack.c.h.b16 %v257
      %v485 = vunpack.c.l.b16 %v258
      %v486 = vunpack.c.h.b16 %v258
      %v487 = vunpack.c.l.b16 %v259
      %v488 = vunpack.c.h.b16 %v259
      %v489 = vunpack.c.l.b16 %v260
      %v490 = vunpack.c.h.b16 %v260
      %v491 = vunpack.c.l.b16 %v261
      %v492 = vunpack.c.h.b16 %v261
      %v493 = vunpack.c.l.b16 %v262
      %v494 = vunpack.c.h.b16 %v262
      %v495 = vunpack.c.l.b16 %v263
      %v496 = vunpack.c.h.b16 %v263
      %v497 = vunpack.c.l.b16 %v264
      %v498 = vunpack.c.h.b16 %v264
      %v499 = vunpack.c.l.b16 %v265
      %v500 = vunpack.c.h.b16 %v265
      %v501 = vunpack.c.l.b16 %v266
      %v502 = vunpack.c.h.b16 %v266
      %v503 = vunpack.c.l.b16 %v267
      %v504 = vunpack.c.h.b16 %v267
      %v505 = vunpack.c.l.b16 %v268
      %v506 = vunpack.c.h.b16 %v268
      %v507 = vunpack.c.l.b16 %v269
      %v508 = vunpack.c.h.b16 %v269
      %v509 = vunpack.c.l.b16 %v270
      %v510 = vunpack.c.h.b16 %v270
      %v511 = vunpack.c.l.b16 %v271
      %v512 = vunpack.c.h.b16 %v271
      %v513 = vunpack.c.l.b16 %v272
      %v514 = vunpack.c.h.b16 %v272
      %v515 = vunpack.c.l.b16 %v273
      %v516 = vunpack.c.h.b16 %v273
      %v517 = vunpack.c.l.b16 %v274
      %v518 = vunpack.c.h.b16 %v274
      %v519 = vunpack.c.l.b16 %v275
      %v520 = vunpack.c.h.b16 %v275
      %v521 = vpack.c.b16 %v459, %v457
      %v522 = vpack.c.b16 %v460, %v458
      %v523 = vpack.c.b16 %v463, %v461
      %v524 = vpack.c.b16 %v464, %v462
      %v525 = vpack.c.b16 %v467, %v465
      %v526 = vpack.c.b16 %v468, %v466
      %v527 = vpack.c.b16 %v471, %v469
      %v528 = vpack.c.b16 %v472, %v470
      %v529 = vpack.c.b16 %v475, %v473
      %v530 = vpack.c.b16 %v476, %v474
      %v531 = vpack.c.b16 %v479, %v477
      %v532 = vpack.c.b16 %v480, %v478
      %v533 = vpack.c.b16 %v483, %v481
      %v534 = vpack.c.b16 %v484, %v482
      %v535 = vpack.c.b16 %v487, %v485
      %v536 = vpack.c.b16 %v488, %v486
      %v537 = vpack.c.b16 %v491, %v489
      %v538 = vpack.c.b16 %v492, %v490
      %v539 = vpack.c.b16 %v495, %v493
      %v540 = vpack.c.b16 %v496, %v494
      %v541 = vpack.c.b16 %v499, %v497
      %v542 = vpack.c.b16 %v500, %v498
      %v543 = vpack.c.b16 %v503, %v501
      %v544 = vpack.c.b16 %v504, %v502
      %v545 = vpack.c.b16 %v507, %v505
      %v546 = vpack.c.b16 %v508, %v506
      %v547 = vpack.c.b16 %v511, %v509
      %v548 = vpack.c.b16 %v512, %v510
      %v549 = vpack.c.b16 %v515, %v513
      %v550 = vpack.c.b16 %v516, %v514
      %v551 = vpack.c.b16 %v519, %v517
      %v552 = vpack.c.b16 %v520, %v518
      %585 = vmatprep.subr.bf16.mxu0 %v522
      %586 = vmatpush1.bf16.msra.mxu0 %v521
      %587 = vmatprep.subr.bf16.mxu0 %v524
      %588 = vmatpush1.bf16.msra.mxu0 %v523
      %589 = vmatprep.subr.bf16.mxu0 %v526
      %590 = vmatpush1.bf16.msra.mxu0 %v525
      %591 = vmatprep.subr.bf16.mxu0 %v528
      %592 = vmatpush1.bf16.msra.mxu0 %v527
      %593 = vmatprep.subr.bf16.mxu0 %v530
      %594 = vmatpush1.bf16.msra.mxu0 %v529
      %595 = vmatprep.subr.bf16.mxu0 %v532
      %596 = vmatpush1.bf16.msra.mxu0 %v531
      %597 = vmatprep.subr.bf16.mxu0 %v534
      %598 = vmatpush1.bf16.msra.mxu0 %v533
      %599 = vmatprep.subr.bf16.mxu0 %v536
      %600 = vmatpush1.bf16.msra.mxu0 %v535
      %601 = vmatprep.subr.bf16.mxu0 %v538
      %602 = vmatpush1.bf16.msra.mxu0 %v537
      %603 = vmatprep.subr.bf16.mxu0 %v540
      %604 = vmatpush1.bf16.msra.mxu0 %v539
      %605 = vmatprep.subr.bf16.mxu0 %v542
      %606 = vmatpush1.bf16.msra.mxu0 %v541
      %607 = vmatprep.subr.bf16.mxu0 %v544
      %608 = vmatpush1.bf16.msra.mxu0 %v543
      %609 = vmatprep.subr.bf16.mxu0 %v546
      %610 = vmatpush1.bf16.msra.mxu0 %v545
      %611 = vmatprep.subr.bf16.mxu0 %v548
      %612 = vmatpush1.bf16.msra.mxu0 %v547
      %613 = vmatprep.subr.bf16.mxu0 %v550
      %614 = vmatpush1.bf16.msra.mxu0 %v549
      %615 = vmatprep.subr.bf16.mxu0 %v552
      %616 = vmatpush1.bf16.msra.mxu0 %v551
      %617 = vmatprep.mubr.bf16.mxu0 %v422
      %618 = vmatmul.mubr.bf16.gmra.mrb[0].mxu0 %v421
      %v619 = vpop.f32.mrb[0].mxu0
      %v620 = vadd.f32 %v408, %v619
      %v621 = vpop.f32.mrb[0].mxu0
      %v622 = vadd.f32 %v410, %v621
      %v623 = vpop.f32.mrb[0].mxu0
      %v624 = vpop.f32.mrb[0].mxu0
      %625 = vdwg.mxu0
      %v626 = vld [vmem:[%s4] sm:$0x3]
      %v628 = vlaneseq
      %v629 = vshrl.u32 %v628, 7
      %v630 = vsub.s32 0, %v629
      %v631 = vrot.slane %v626, %v630
      %v632 = vlaneseq
      %v633 = vshrl.u32 %v632, 7
      %v634 = vsub.s32 1, %v633
      %v635 = vrot.slane %v626, %v634
      %v638 = vadd.f32 %v620, %v631
      %v639 = vadd.f32 %v622, %v635
      %v640 = vpack.c.bf16 %v638, %v638
      %v641 = vpack.c.bf16 %v639, %v639
      %v644 = vcombine.low %v640, %v641
      %v646 = vunpack.c.l.s4 1983009808
      %v647 = vunpack.c.0.s8 %v646
      %v648 = vlaneseq
      %v649 = vshrl.u32 %v648, 7
      %v650 = vsub.s32 %v647, %v649
      %v651 = vrot.slane %v644, %v650
      %653 = vst [vmem:[%s241] sm:$0xf] %v651
      %p654 = scmp.lt.s32.totalorder %s16, 1
      %s655 = scalar_select %p654, %s16, 1
      %s656 = smul.addr %s655, 2
      %s657 = smul.addr %s656, 2
      %s658 = scalar_lea.vmem %s5, %s657
      // Predicated region
      $region41: #{model_forward.6} parent=39 // pred_check
        %p659 = pneg %p149
      $region42: #{model_forward.6} parent=39 // pred_check_branch
        %661 = sbr.rel (%p659) target = $region44
      $region43: #{model_forward.6} parent=39 // pred_region
        _
      $region44: #{model_forward.6} parent=39 // pred_fallthru
        _
    $region40: #{model_forward.6} parent=5 // pred_fallthru
      _
    %p662 = scmp.le.s32.totalorder 2, %s11
    // Predicated region
    $region45: #{model_forward.6} parent=5 // pred_check
      %p663 = pneg %p662
    $region46: #{model_forward.6} parent=5 // pred_check_branch
      %665 = sbr.rel (%p663) target = $region48
    $region47: #{model_forward.6} parent=5 // pred_region
      %s666 = ssub.s32 %s11, 2
      // Predicated region
      $region49: #{model_forward.6} parent=47 // pred_check
        %p667 = pneg %p155
      $region50: #{model_forward.6} parent=47 // pred_check_branch
        %669 = sbr.rel (%p667) target = $region52
      $region51: #{model_forward.6} parent=47 // pred_region
        %p670 = scmp.lt.s32.totalorder %s17, 1
        %s671 = scalar_select %p670, %s17, 1
        %s672 = smul.addr %s671, 2
        %s673 = smul.addr %s672, 2
        %s674 = scalar_lea.vmem %s5, %s673
      $region52: #{model_forward.6} parent=47 // pred_fallthru
        _
    $region48: #{model_forward.6} parent=5 // pred_fallthru
      _
  $region6: #{model_forward.6} parent=0 // loop_footer
    %s15 = sadd.s32 1, %s11
  $region7: #{model_forward.6} parent=0 // loop_footer_branch
    %10 = sbr.rel target = $region3
  $region8: #{model_forward.6} parent=0 // loop_exit
    _

// kernel: model_forward.5
$region0: #{model_forward.5}
  #allocation0 [shape = 'u32[]', space=smem, size = 0x4, offset = 0x4, fixed_abs, tag = 'smem constant byte address 0x4 - core index']
  #allocation1 [shape = 'u32[144,128]{1,0:T(1,128)}', space=vmem, size = 0x12000, scoped, tag = 'internal scratch']
  %s0 = inlined_call_operand.vmem [shape: bf16[2,5,320], index: 0, kind: input, shape index: {}]
  %s1 = inlined_call_operand.vmem [shape: bf16[2,320,128], index: 1, kind: input, shape index: {}]
  %s2 = inlined_call_operand.vmem [shape: f32[1,128], index: 2, kind: input, shape index: {}]
  %s3 = inlined_call_operand.vmem [shape: bf16[2,4,128], index: 3, kind: output, shape index: {}]
  %s4 = sld [smem:[#allocation0]]
  $region45: #{model_forward.5} parent=0
    _
  %s6 = ssub.s32 1, %s4
  %s7 = scalar_select 0, %s6, %s4
  loop: start=0, step=1, limit=4
  $region2: #{model_forward.5} parent=0 // loop_pre_header
    _
  $region3: #{model_forward.5} parent=0 // loop_header
    %s9 = sphi 0, %s13
    %p10 = scmp.ge.s32.totalorder %s9, 4
    %s19 = sphi 0, %s21
    %s22 = sphi 0, %s19
    %s23 = sphi 0, %s22
    %s39 = sphi 0, %s23
    %s43 = sphi 0, %s43
    %s45 = sphi 0, %s43
    %s46 = sphi 0, %s45
    %s60 = sphi 0, %s46
    %s64 = sphi 0, %s64
    %s66 = sphi 0, %s64
    %s67 = sphi 0, %s66
    %s81 = sphi 0, %s67
    %s87 = sphi 0, %s89
    %s90 = sphi 0, %s87
    %s91 = sphi 0, %s90
    %s107 = sphi 0, %s91
  $region4: #{model_forward.5} parent=0 // loop_header_branch
    %12 = sbr.rel (%p10) target = $region8
  $region5: #{model_forward.5} parent=0 // loop_body
    %s14 = ssub.s32 %s9, 1
    %s15 = ssub.s32 %s9, 2
    %s16 = sadd.s32 %s9, 1
    %s17 = ssub.s32 %s9, %s16
    %p18 = scmp.eq.s32.totalorder %s17, 0
    %s20 = sadd.s32 %s19, 1
    %s21 = scalar_select %p18, %s19, %s20
    %p24 = pneg %p18
    %p25 = scmp.eq.s32.totalorder %s9, 1
    %p26 = por %p24, %p25
    %p27 = scmp.ne.s32.totalorder %s19, %s22
    %p28 = scmp.eq.s32.totalorder %s9, 0
    %p29 = por %p27, %p28
    %p30 = scmp.ne.s32.totalorder %s19, %s22
    %p31 = scmp.eq.s32.totalorder %s14, 1
    %p32 = por %p30, %p31
    %p33 = scmp.ne.s32.totalorder %s22, %s23
    %p34 = scmp.eq.s32.totalorder %s14, 0
    %p35 = por %p33, %p34
    %p36 = scmp.ne.s32.totalorder %s22, %s23
    %p37 = scmp.eq.s32.totalorder %s15, 1
    %p38 = por %p36, %p37
    %p40 = scmp.ne.s32.totalorder %s23, %s39
    %p41 = scmp.eq.s32.totalorder %s15, 0
    %p42 = por %p40, %p41
    %s44 = sadd.s32 %s43, 1
    %p47 = scmp.eq.s32.totalorder %s9, 1
    %p48 = scmp.ne.s32.totalorder %s43, %s45
    %p49 = scmp.eq.s32.totalorder %s9, 0
    %p50 = por %p48, %p49
    %p51 = scmp.ne.s32.totalorder %s43, %s45
    %p52 = scmp.eq.s32.totalorder %s14, 1
    %p53 = por %p51, %p52
    %p54 = scmp.ne.s32.totalorder %s45, %s46
    %p55 = scmp.eq.s32.totalorder %s14, 0
    %p56 = por %p54, %p55
    %p57 = scmp.ne.s32.totalorder %s45, %s46
    %p58 = scmp.eq.s32.totalorder %s15, 1
    %p59 = por %p57, %p58
    %p61 = scmp.ne.s32.totalorder %s46, %s60
    %p62 = scmp.eq.s32.totalorder %s15, 0
    %p63 = por %p61, %p62
    %s65 = sadd.s32 %s64, 1
    %p68 = scmp.eq.s32.totalorder %s9, 1
    %p69 = scmp.ne.s32.totalorder %s64, %s66
    %p70 = scmp.eq.s32.totalorder %s9, 0
    %p71 = por %p69, %p70
    %p72 = scmp.ne.s32.totalorder %s64, %s66
    %p73 = scmp.eq.s32.totalorder %s14, 1
    %p74 = por %p72, %p73
    %p75 = scmp.ne.s32.totalorder %s66, %s67
    %p76 = scmp.eq.s32.totalorder %s14, 0
    %p77 = por %p75, %p76
    %p78 = scmp.ne.s32.totalorder %s66, %s67
    %p79 = scmp.eq.s32.totalorder %s15, 1
    %p80 = por %p78, %p79
    %p82 = scmp.ne.s32.totalorder %s67, %s81
    %p83 = scmp.eq.s32.totalorder %s15, 0
    %p84 = por %p82, %p83
    %s85 = ssub.s32 %s9, %s16
    %p86 = scmp.eq.s32.totalorder %s85, 0
    %s88 = sadd.s32 %s87, 1
    %s89 = scalar_select %p86, %s87, %s88
    %p92 = pneg %p86
    %p93 = scmp.eq.s32.totalorder %s9, 1
    %p94 = por %p92, %p93
    %p95 = scmp.ne.s32.totalorder %s87, %s90
    %p96 = scmp.eq.s32.totalorder %s9, 0
    %p97 = por %p95, %p96
    %p98 = scmp.ne.s32.totalorder %s87, %s90
    %p99 = scmp.eq.s32.totalorder %s14, 1
    %p100 = por %p98, %p99
    %p101 = scmp.ne.s32.totalorder %s90, %s91
    %p102 = scmp.eq.s32.totalorder %s14, 0
    %p103 = por %p101, %p102
    %p104 = scmp.ne.s32.totalorder %s90, %s91
    %p105 = scmp.eq.s32.totalorder %s15, 1
    %p106 = por %p104, %p105
    %p108 = scmp.ne.s32.totalorder %s91, %s107
    %p109 = scmp.eq.s32.totalorder %s15, 0
    %p110 = por %p108, %p109
    %p111 = scmp.le.s32.totalorder 1, %s9
    %p112 = scmp.lt.s32.totalorder %s9, 3
    %p113 = pnand %p111, %p112
    %p114 = pneg %p113
    // Predicated region
    $region9: #{model_forward.5} parent=5 // pred_check
      _
    $region10: #{model_forward.5} parent=5 // pred_check_branch
      %116 = sbr.rel (%p113) target = $region12
    $region11: #{model_forward.5} parent=5 // pred_region
      %s117 = ssub.s32 %s9, 1
      // Predicated region
      $region13: #{model_forward.5} parent=11 // pred_check
        %p118 = pneg %p56
      $region14: #{model_forward.5} parent=11 // pred_check_branch
        %120 = sbr.rel (%p118) target = $region16
      $region15: #{model_forward.5} parent=11 // pred_region
        _
      $region16: #{model_forward.5} parent=11 // pred_fallthru
        _
      // Predicated region
      $region17: #{model_forward.5} parent=11 // pred_check
        %p121 = pneg %p77
      $region18: #{model_forward.5} parent=11 // pred_check_branch
        %123 = sbr.rel (%p121) target = $region20
      $region19: #{model_forward.5} parent=11 // pred_region
        _
      $region20: #{model_forward.5} parent=11 // pred_fallthru
        _
    $region12: #{model_forward.5} parent=5 // pred_fallthru
      _
    %p124 = scmp.lt.s32.totalorder %s9, 2
    // Predicated region
    $region21: #{model_forward.5} parent=5 // pred_check
      %p125 = pneg %p124
    $region22: #{model_forward.5} parent=5 // pred_check_branch
      %127 = sbr.rel (%p125) target = $region24
    $region23: #{model_forward.5} parent=5 // pred_region
      // Predicated region
      $region25: #{model_forward.5} parent=23 // pred_check
        %p128 = pneg %p29
      $region26: #{model_forward.5} parent=23 // pred_check_branch
        %130 = sbr.rel (%p128) target = $region28
      $region27: #{model_forward.5} parent=23 // pred_region
        %p131 = scmp.lt.s32.totalorder %s9, 1
        %s132 = scalar_select %p131, %s9, 1
        %s133 = smul.addr %s132, 3
        %s134 = smul.addr %s133, 4
        %s135 = scalar_lea.vmem %s0, %s134
      $region28: #{model_forward.5} parent=23 // pred_fallthru
        _
    $region24: #{model_forward.5} parent=5 // pred_fallthru
      _
    %p136 = scmp.le.s32.totalorder 1, %s9
    %p137 = scmp.lt.s32.totalorder %s9, 3
    %p138 = pnand %p136, %p137
    %p139 = pneg %p138
    // Predicated region
    $region29: #{model_forward.5} parent=5 // pred_check
      _
    $region30: #{model_forward.5} parent=5 // pred_check_branch
      %141 = sbr.rel (%p138) target = $region32
    $region31: #{model_forward.5} parent=5 // pred_region
      %s142 = ssub.s32 %s9, 1
      %p143 = scmp.lt.s32.totalorder %s14, 1
      %s144 = scalar_select %p143, %s14, 1
      %s145 = smul.addr %s144, 3
      %s146 = smul.addr %s145, 4
      %s147 = scalar_lea.vmem %s0, %s146
      %p148 = pneg %p35
      %p149 = pneg %p32
      %p150 = pneg %p56
      %p151 = pneg %p53
      %p152 = pneg %p77
      %p153 = pneg %p74
      %p154 = pneg %p103
      %p155 = pneg %p100
      %p156 = scmp.lt.s32.totalorder %s14, 1
      %s157 = scalar_select %p156, %s14, 1
      %s158 = smul.addr %s157, 2
      %s159 = scalar_lea.vmem %s3, %s158
      %p160 = scmp.lt.s32.totalorder %s14, 1
      %s161 = scalar_select %p160, %s14, 1
      %s162 = smul.addr %s161, 3
      %s163 = smul.addr %s162, 4
      %s164 = scalar_lea.vmem %s0, %s163
      %p165 = scmp.lt.s32.totalorder %s14, 1
      %s166 = scalar_select %p165, %s14, 1
      %s167 = smul.addr %s166, 2
      %s168 = scalar_lea.vmem %s3, %s167
      %v170 = vld [vmem:[%s164] sm:$0x33]
      %v171 = vld [vmem:[%s164 + $0x8] sm:$0x3]
      %v172 = vld [vmem:[%s1] sm:$0xf]
      %v173 = vld [vmem:[%s1 + $0x4] sm:$0xf]
      %v174 = vld [vmem:[%s1 + $0x8] sm:$0xf]
      %v175 = vld [vmem:[%s1 + $0xc] sm:$0xf]
      %v176 = vld [vmem:[%s1 + $0x10] sm:$0xf]
      %v177 = vld [vmem:[%s1 + $0x14] sm:$0xf]
      %v178 = vld [vmem:[%s1 + $0x18] sm:$0xf]
      %v179 = vld [vmem:[%s1 + $0x1c] sm:$0xf]
      %v180 = vld [vmem:[%s1 + $0x20] sm:$0xf]
      %v181 = vld [vmem:[%s1 + $0x24] sm:$0xf]
      %v182 = vld [vmem:[%s1 + $0x28] sm:$0xf]
      %v183 = vld [vmem:[%s1 + $0x2c] sm:$0xf]
      %v184 = vld [vmem:[%s1 + $0x30] sm:$0xf]
      %v185 = vld [vmem:[%s1 + $0x34] sm:$0xf]
      %v186 = vld [vmem:[%s1 + $0x38] sm:$0xf]
      %v187 = vld [vmem:[%s1 + $0x3c] sm:$0xf]
      %v188 = vld [vmem:[%s1 + $0x40] sm:$0xf]
      %v189 = vld [vmem:[%s1 + $0x44] sm:$0xf]
      %v190 = vld [vmem:[%s1 + $0x48] sm:$0xf]
      %v191 = vld [vmem:[%s1 + $0x4c] sm:$0xf]
      %v192 = vld [vmem:[%s1 + $0x50] sm:$0xf]
      %v193 = vld [vmem:[%s1 + $0x54] sm:$0xf]
      %v194 = vld [vmem:[%s1 + $0x58] sm:$0xf]
      %v195 = vld [vmem:[%s1 + $0x5c] sm:$0xf]
      %v196 = vld [vmem:[%s1 + $0x60] sm:$0xf]
      %v197 = vld [vmem:[%s1 + $0x64] sm:$0xf]
      %v198 = vld [vmem:[%s1 + $0x68] sm:$0xf]
      %v199 = vld [vmem:[%s1 + $0x6c] sm:$0xf]
      %v200 = vld [vmem:[%s1 + $0x70] sm:$0xf]
      %v201 = vld [vmem:[%s1 + $0x74] sm:$0xf]
      %v202 = vld [vmem:[%s1 + $0x78] sm:$0xf]
      %v203 = vld [vmem:[%s1 + $0x7c] sm:$0xf]
      %v204 = vld [vmem:[%s1 + $0x80] sm:$0xf]
      %v205 = vld [vmem:[%s1 + $0x84] sm:$0xf]
      %v206 = vld [vmem:[%s1 + $0x88] sm:$0xf]
      %v207 = vld [vmem:[%s1 + $0x8c] sm:$0xf]
      %v208 = vld [vmem:[%s1 + $0x90] sm:$0xf]
      %v209 = vld [vmem:[%s1 + $0x94] sm:$0xf]
      %v210 = vld [vmem:[%s1 + $0x98] sm:$0xf]
      %v211 = vld [vmem:[%s1 + $0x9c] sm:$0xf]
      %v212 = vld [vmem:[%s164] sm:$0x77]
      %v213 = vld [vmem:[%s164 + $0x8] sm:$0x7]
      %s214 = scalar_lea.vmem %s1, 160
      %v215 = vld [vmem:[%s214] sm:$0xf]
      %v216 = vld [vmem:[%s214 + $0x4] sm:$0xf]
      %v217 = vld [vmem:[%s214 + $0x8] sm:$0xf]
      %v218 = vld [vmem:[%s214 + $0xc] sm:$0xf]
      %v219 = vld [vmem:[%s214 + $0x10] sm:$0xf]
      %v220 = vld [vmem:[%s214 + $0x14] sm:$0xf]
      %v221 = vld [vmem:[%s214 + $0x18] sm:$0xf]
      %v222 = vld [vmem:[%s214 + $0x1c] sm:$0xf]
      %v223 = vld [vmem:[%s214 + $0x20] sm:$0xf]
      %v224 = vld [vmem:[%s214 + $0x24] sm:$0xf]
      %v225 = vld [vmem:[%s214 + $0x28] sm:$0xf]
      %v226 = vld [vmem:[%s214 + $0x2c] sm:$0xf]
      %v227 = vld [vmem:[%s214 + $0x30] sm:$0xf]
      %v228 = vld [vmem:[%s214 + $0x34] sm:$0xf]
      %v229 = vld [vmem:[%s214 + $0x38] sm:$0xf]
      %v230 = vld [vmem:[%s214 + $0x3c] sm:$0xf]
      %v231 = vld [vmem:[%s214 + $0x40] sm:$0xf]
      %v232 = vld [vmem:[%s214 + $0x44] sm:$0xf]
      %v233 = vld [vmem:[%s214 + $0x48] sm:$0xf]
      %v234 = vld [vmem:[%s214 + $0x4c] sm:$0xf]
      %v235 = vld [vmem:[%s214 + $0x50] sm:$0xf]
      %v236 = vld [vmem:[%s214 + $0x54] sm:$0xf]
      %v237 = vld [vmem:[%s214 + $0x58] sm:$0xf]
      %v238 = vld [vmem:[%s214 + $0x5c] sm:$0xf]
      %v239 = vld [vmem:[%s214 + $0x60] sm:$0xf]
      %v240 = vld [vmem:[%s214 + $0x64] sm:$0xf]
      %v241 = vld [vmem:[%s214 + $0x68] sm:$0xf]
      %v242 = vld [vmem:[%s214 + $0x6c] sm:$0xf]
      %v243 = vld [vmem:[%s214 + $0x70] sm:$0xf]
      %v244 = vld [vmem:[%s214 + $0x74] sm:$0xf]
      %v245 = vld [vmem:[%s214 + $0x78] sm:$0xf]
      %v246 = vld [vmem:[%s214 + $0x7c] sm:$0xf]
      %v247 = vld [vmem:[%s214 + $0x80] sm:$0xf]
      %v248 = vld [vmem:[%s214 + $0x84] sm:$0xf]
      %v249 = vld [vmem:[%s214 + $0x88] sm:$0xf]
      %v250 = vld [vmem:[%s214 + $0x8c] sm:$0xf]
      %v251 = vld [vmem:[%s214 + $0x90] sm:$0xf]
      %v252 = vld [vmem:[%s214 + $0x94] sm:$0xf]
      %v253 = vld [vmem:[%s214 + $0x98] sm:$0xf]
      %v254 = vld [vmem:[%s214 + $0x9c] sm:$0xf]
      %v257 = vunpack.c.l.b16 %v212
      %v258 = vunpack.c.h.b16 %v212
      %v259 = vunpack.c.l.b16 %v213
      %v260 = vpack.c.b16 %v257, %v257
      %v261 = vpack.c.b16 %v258, %v258
      %v262 = vpack.c.b16 %v259, %v259
      %v264 = vshrl.u32 %v260, 16
      %v266 = vshll.u32 %v260, 16
      %v268 = vrot.slane %v266, 1
      %v269 = vor.u32 %v264, %v268
      %v271 = vshrl.u32 %v261, 16
      %v273 = vshll.u32 %v261, 16
      %v275 = vrot.slane %v273, 1
      %v276 = vor.u32 %v271, %v275
      %v278 = vshrl.u32 %v262, 16
      %v280 = vshll.u32 %v262, 16
      %v282 = vrot.slane %v280, 1
      %v283 = vor.u32 %v278, %v282
      %v326 = vunpack.c.l.b16 %v215
      %v327 = vunpack.c.l.b16 %v216
      %v328 = vunpack.c.l.b16 %v217
      %v329 = vunpack.c.l.b16 %v218
      %v330 = vunpack.c.l.b16 %v219
      %v331 = vunpack.c.l.b16 %v220
      %v332 = vunpack.c.l.b16 %v221
      %v333 = vunpack.c.l.b16 %v222
      %v334 = vunpack.c.l.b16 %v223
      %v335 = vunpack.c.l.b16 %v224
      %v336 = vunpack.c.l.b16 %v225
      %v337 = vunpack.c.l.b16 %v226
      %v338 = vunpack.c.l.b16 %v227
      %v339 = vunpack.c.l.b16 %v228
      %v340 = vunpack.c.l.b16 %v229
      %v341 = vunpack.c.l.b16 %v230
      %v342 = vunpack.c.l.b16 %v231
      %v343 = vunpack.c.l.b16 %v232
      %v344 = vunpack.c.l.b16 %v233
      %v345 = vunpack.c.l.b16 %v234
      %v346 = vunpack.c.l.b16 %v235
      %v347 = vunpack.c.l.b16 %v236
      %v348 = vunpack.c.l.b16 %v237
      %v349 = vunpack.c.l.b16 %v238
      %v350 = vunpack.c.l.b16 %v239
      %v351 = vunpack.c.l.b16 %v240
      %v352 = vunpack.c.l.b16 %v241
      %v353 = vunpack.c.l.b16 %v242
      %v354 = vunpack.c.l.b16 %v243
      %v355 = vunpack.c.l.b16 %v244
      %v356 = vunpack.c.l.b16 %v245
      %v357 = vunpack.c.l.b16 %v246
      %v358 = vunpack.c.l.b16 %v247
      %v359 = vunpack.c.l.b16 %v248
      %v360 = vunpack.c.l.b16 %v249
      %v361 = vunpack.c.l.b16 %v250
      %v362 = vunpack.c.l.b16 %v251
      %v363 = vunpack.c.l.b16 %v252
      %v364 = vunpack.c.l.b16 %v253
      %v365 = vunpack.c.l.b16 %v254
      %v366 = vpack.c.b16 %v327, %v326
      %v367 = vpack.c.b16 %v329, %v328
      %v368 = vpack.c.b16 %v331, %v330
      %v369 = vpack.c.b16 %v333, %v332
      %v370 = vpack.c.b16 %v335, %v334
      %v371 = vpack.c.b16 %v337, %v336
      %v372 = vpack.c.b16 %v339, %v338
      %v373 = vpack.c.b16 %v341, %v340
      %v374 = vpack.c.b16 %v343, %v342
      %v375 = vpack.c.b16 %v345, %v344
      %v376 = vpack.c.b16 %v347, %v346
      %v377 = vpack.c.b16 %v349, %v348
      %v378 = vpack.c.b16 %v351, %v350
      %v379 = vpack.c.b16 %v353, %v352
      %v380 = vpack.c.b16 %v355, %v354
      %v381 = vpack.c.b16 %v357, %v356
      %v382 = vpack.c.b16 %v359, %v358
      %v383 = vpack.c.b16 %v361, %v360
      %v384 = vpack.c.b16 %v363, %v362
      %v385 = vpack.c.b16 %v365, %v364
      %vm406 = vcmask 523264
      %v408 = vsel %vm406, %v283, 0
      %410 = vmatprep.subr.bf16.mxu0 0
      %411 = vmatpush1.bf16.msra.mxu0 %v366
      %412 = vmatprep.subr.bf16.mxu0 0
      %413 = vmatpush1.bf16.msra.mxu0 %v367
      %414 = vmatprep.subr.bf16.mxu0 0
      %415 = vmatpush1.bf16.msra.mxu0 %v368
      %416 = vmatprep.subr.bf16.mxu0 0
      %417 = vmatpush1.bf16.msra.mxu0 %v369
      %418 = vmatprep.subr.bf16.mxu0 0
      %419 = vmatpush1.bf16.msra.mxu0 %v370
      %420 = vmatprep.subr.bf16.mxu0 0
      %421 = vmatpush1.bf16.msra.mxu0 %v371
      %422 = vmatprep.subr.bf16.mxu0 0
      %423 = vmatpush1.bf16.msra.mxu0 %v372
      %424 = vmatprep.subr.bf16.mxu0 0
      %425 = vmatpush1.bf16.msra.mxu0 %v373
      %426 = vmatprep.subr.bf16.mxu0 0
      %427 = vmatpush1.bf16.msra.mxu0 %v374
      %428 = vmatprep.subr.bf16.mxu0 0
      %429 = vmatpush1.bf16.msra.mxu0 %v375
      %430 = vmatprep.subr.bf16.mxu0 0
      %431 = vmatpush1.bf16.msra.mxu0 %v376
      %432 = vmatprep.subr.bf16.mxu0 0
      %433 = vmatpush1.bf16.msra.mxu0 %v377
      %434 = vmatprep.subr.bf16.mxu0 0
      %435 = vmatpush1.bf16.msra.mxu0 %v378
      %436 = vmatprep.subr.bf16.mxu0 0
      %437 = vmatpush1.bf16.msra.mxu0 %v379
      %438 = vmatprep.subr.bf16.mxu0 0
      %439 = vmatpush1.bf16.msra.mxu0 %v380
      %440 = vmatprep.subr.bf16.mxu0 0
      %441 = vmatpush1.bf16.msra.mxu0 %v381
      %442 = vmatprep.mubr.bf16.mxu0 %v276
      %443 = vmatmul.mubr.bf16.gmra.mrb[0].mxu0 %v269
      %v444 = vpop.f32.mrb[0].mxu0
      %v445 = vadd.f32 0.0, %v444
      %v446 = vpop.f32.mrb[0].mxu0
      %v447 = vpop.f32.mrb[0].mxu0
      %v448 = vpop.f32.mrb[0].mxu0
      %449 = vdwg.mxu0
      %450 = vmatprep.subr.bf16.mxu0 0
      %451 = vmatpush1.bf16.msra.mxu0 %v382
      %452 = vmatprep.subr.bf16.mxu0 0
      %453 = vmatpush1.bf16.msra.mxu0 %v383
      %454 = vmatprep.subr.bf16.mxu0 0
      %455 = vmatpush1.bf16.msra.mxu0 %v384
      %456 = vmatprep.subr.bf16.mxu0 0
      %457 = vmatpush1.bf16.msra.mxu0 %v385
      %458 = vmatprep.subr.bf16.mxu0 0
      %459 = vmatpush1.bf16.msra.mxu0 0
      %460 = vmatprep.subr.bf16.mxu0 0
      %461 = vmatpush1.bf16.msra.mxu0 0
      %462 = vmatprep.subr.bf16.mxu0 0
      %463 = vmatpush1.bf16.msra.mxu0 0
      %464 = vmatprep.subr.bf16.mxu0 0
      %465 = vmatpush1.bf16.msra.mxu0 0
      %466 = vmatprep.subr.bf16.mxu0 0
      %467 = vmatpush1.bf16.msra.mxu0 0
      %468 = vmatprep.subr.bf16.mxu0 0
      %469 = vmatpush1.bf16.msra.mxu0 0
      %470 = vmatprep.subr.bf16.mxu0 0
      %471 = vmatpush1.bf16.msra.mxu0 0
      %472 = vmatprep.subr.bf16.mxu0 0
      %473 = vmatpush1.bf16.msra.mxu0 0
      %474 = vmatprep.subr.bf16.mxu0 0
      %475 = vmatpush1.bf16.msra.mxu0 0
      %476 = vmatprep.subr.bf16.mxu0 0
      %477 = vmatpush1.bf16.msra.mxu0 0
      %478 = vmatprep.subr.bf16.mxu0 0
      %479 = vmatpush1.bf16.msra.mxu0 0
      %480 = vmatprep.subr.bf16.mxu0 0
      %481 = vmatpush1.bf16.msra.mxu0 0
      %482 = vmatprep.mubr.bf16.mxu0 0
      %483 = vmatmul.mubr.bf16.gmra.mrb[0].mxu0 %v408
      %v484 = vpop.f32.mrb[0].mxu0
      %v485 = vadd.f32 %v445, %v484
      %v486 = vpop.f32.mrb[0].mxu0
      %v487 = vpop.f32.mrb[0].mxu0
      %v488 = vpop.f32.mrb[0].mxu0
      %489 = vdwg.mxu0
      %v492 = vunpack.c.l.b16 %v170
      %v493 = vunpack.c.h.b16 %v170
      %v494 = vunpack.c.l.b16 %v171
      %v495 = vpack.c.b16 %v492, %v492
      %v496 = vpack.c.b16 %v493, %v493
      %v497 = vpack.c.b16 %v494, %v494
      %v540 = vunpack.c.l.b16 %v172
      %v541 = vunpack.c.l.b16 %v173
      %v542 = vunpack.c.l.b16 %v174
      %v543 = vunpack.c.l.b16 %v175
      %v544 = vunpack.c.l.b16 %v176
      %v545 = vunpack.c.l.b16 %v177
      %v546 = vunpack.c.l.b16 %v178
      %v547 = vunpack.c.l.b16 %v179
      %v548 = vunpack.c.l.b16 %v180
      %v549 = vunpack.c.l.b16 %v181
      %v550 = vunpack.c.l.b16 %v182
      %v551 = vunpack.c.l.b16 %v183
      %v552 = vunpack.c.l.b16 %v184
      %v553 = vunpack.c.l.b16 %v185
      %v554 = vunpack.c.l.b16 %v186
      %v555 = vunpack.c.l.b16 %v187
      %v556 = vunpack.c.l.b16 %v188
      %v557 = vunpack.c.l.b16 %v189
      %v558 = vunpack.c.l.b16 %v190
      %v559 = vunpack.c.l.b16 %v191
      %v560 = vunpack.c.l.b16 %v192
      %v561 = vunpack.c.l.b16 %v193
      %v562 = vunpack.c.l.b16 %v194
      %v563 = vunpack.c.l.b16 %v195
      %v564 = vunpack.c.l.b16 %v196
      %v565 = vunpack.c.l.b16 %v197
      %v566 = vunpack.c.l.b16 %v198
      %v567 = vunpack.c.l.b16 %v199
      %v568 = vunpack.c.l.b16 %v200
      %v569 = vunpack.c.l.b16 %v201
      %v570 = vunpack.c.l.b16 %v202
      %v571 = vunpack.c.l.b16 %v203
      %v572 = vunpack.c.l.b16 %v204
      %v573 = vunpack.c.l.b16 %v205
      %v574 = vunpack.c.l.b16 %v206
      %v575 = vunpack.c.l.b16 %v207
      %v576 = vunpack.c.l.b16 %v208
      %v577 = vunpack.c.l.b16 %v209
      %v578 = vunpack.c.l.b16 %v210
      %v579 = vunpack.c.l.b16 %v211
      %v580 = vpack.c.b16 %v541, %v540
      %v581 = vpack.c.b16 %v543, %v542
      %v582 = vpack.c.b16 %v545, %v544
      %v583 = vpack.c.b16 %v547, %v546
      %v584 = vpack.c.b16 %v549, %v548
      %v585 = vpack.c.b16 %v551, %v550
      %v586 = vpack.c.b16 %v553, %v552
      %v587 = vpack.c.b16 %v555, %v554
      %v588 = vpack.c.b16 %v557, %v556
      %v589 = vpack.c.b16 %v559, %v558
      %v590 = vpack.c.b16 %v561, %v560
      %v591 = vpack.c.b16 %v563, %v562
      %v592 = vpack.c.b16 %v565, %v564
      %v593 = vpack.c.b16 %v567, %v566
      %v594 = vpack.c.b16 %v569, %v568
      %v595 = vpack.c.b16 %v571, %v570
      %v596 = vpack.c.b16 %v573, %v572
      %v597 = vpack.c.b16 %v575, %v574
      %v598 = vpack.c.b16 %v577, %v576
      %v599 = vpack.c.b16 %v579, %v578
      %v621 = vsel %vm406, %v497, 0
      %623 = vmatprep.subr.bf16.mxu0 0
      %624 = vmatpush1.bf16.msra.mxu0 %v580
      %625 = vmatprep.subr.bf16.mxu0 0
      %626 = vmatpush1.bf16.msra.mxu0 %v581
      %627 = vmatprep.subr.bf16.mxu0 0
      %628 = vmatpush1.bf16.msra.mxu0 %v582
      %629 = vmatprep.subr.bf16.mxu0 0
      %630 = vmatpush1.bf16.msra.mxu0 %v583
      %631 = vmatprep.subr.bf16.mxu0 0
      %632 = vmatpush1.bf16.msra.mxu0 %v584
      %633 = vmatprep.subr.bf16.mxu0 0
      %634 = vmatpush1.bf16.msra.mxu0 %v585
      %635 = vmatprep.subr.bf16.mxu0 0
      %636 = vmatpush1.bf16.msra.mxu0 %v586
      %637 = vmatprep.subr.bf16.mxu0 0
      %638 = vmatpush1.bf16.msra.mxu0 %v587
      %639 = vmatprep.subr.bf16.mxu0 0
      %640 = vmatpush1.bf16.msra.mxu0 %v588
      %641 = vmatprep.subr.bf16.mxu0 0
      %642 = vmatpush1.bf16.msra.mxu0 %v589
      %643 = vmatprep.subr.bf16.mxu0 0
      %644 = vmatpush1.bf16.msra.mxu0 %v590
      %645 = vmatprep.subr.bf16.mxu0 0
      %646 = vmatpush1.bf16.msra.mxu0 %v591
      %647 = vmatprep.subr.bf16.mxu0 0
      %648 = vmatpush1.bf16.msra.mxu0 %v592
      %649 = vmatprep.subr.bf16.mxu0 0
      %650 = vmatpush1.bf16.msra.mxu0 %v593
      %651 = vmatprep.subr.bf16.mxu0 0
      %652 = vmatpush1.bf16.msra.mxu0 %v594
      %653 = vmatprep.subr.bf16.mxu0 0
      %654 = vmatpush1.bf16.msra.mxu0 %v595
      %655 = vmatprep.mubr.bf16.mxu0 %v496
      %656 = vmatmul.mubr.bf16.gmra.mrb[0].mxu0 %v495
      %v657 = vpop.f32.mrb[0].mxu0
      %v658 = vadd.f32 %v485, %v657
      %v659 = vpop.f32.mrb[0].mxu0
      %v660 = vpop.f32.mrb[0].mxu0
      %v661 = vpop.f32.mrb[0].mxu0
      %662 = vdwg.mxu0
      %663 = vmatprep.subr.bf16.mxu0 0
      %664 = vmatpush1.bf16.msra.mxu0 %v596
      %665 = vmatprep.subr.bf16.mxu0 0
      %666 = vmatpush1.bf16.msra.mxu0 %v597
      %667 = vmatprep.subr.bf16.mxu0 0
      %668 = vmatpush1.bf16.msra.mxu0 %v598
      %669 = vmatprep.subr.bf16.mxu0 0
      %670 = vmatpush1.bf16.msra.mxu0 %v599
      %671 = vmatprep.subr.bf16.mxu0 0
      %672 = vmatpush1.bf16.msra.mxu0 0
      %673 = vmatprep.subr.bf16.mxu0 0
      %674 = vmatpush1.bf16.msra.mxu0 0
      %675 = vmatprep.subr.bf16.mxu0 0
      %676 = vmatpush1.bf16.msra.mxu0 0
      %677 = vmatprep.subr.bf16.mxu0 0
      %678 = vmatpush1.bf16.msra.mxu0 0
      %679 = vmatprep.subr.bf16.mxu0 0
      %680 = vmatpush1.bf16.msra.mxu0 0
      %681 = vmatprep.subr.bf16.mxu0 0
      %682 = vmatpush1.bf16.msra.mxu0 0
      %683 = vmatprep.subr.bf16.mxu0 0
      %684 = vmatpush1.bf16.msra.mxu0 0
      %685 = vmatprep.subr.bf16.mxu0 0
      %686 = vmatpush1.bf16.msra.mxu0 0
      %687 = vmatprep.subr.bf16.mxu0 0
      %688 = vmatpush1.bf16.msra.mxu0 0
      %689 = vmatprep.subr.bf16.mxu0 0
      %690 = vmatpush1.bf16.msra.mxu0 0
      %691 = vmatprep.subr.bf16.mxu0 0
      %692 = vmatpush1.bf16.msra.mxu0 0
      %693 = vmatprep.subr.bf16.mxu0 0
      %694 = vmatpush1.bf16.msra.mxu0 0
      %695 = vmatprep.mubr.bf16.mxu0 0
      %696 = vmatmul.mubr.bf16.gmra.mrb[0].mxu0 %v621
      %v697 = vpop.f32.mrb[0].mxu0
      %v698 = vadd.f32 %v658, %v697
      %v699 = vpop.f32.mrb[0].mxu0
      %v700 = vpop.f32.mrb[0].mxu0
      %v701 = vpop.f32.mrb[0].mxu0
      %702 = vdwg.mxu0
      %v703 = vld [vmem:[%s2] sm:$0x1]
      %v705 = vlaneseq
      %v706 = vshrl.u32 %v705, 7
      %v707 = vsub.s32 0, %v706
      %v708 = vrot.slane %v703, %v707
      %v710 = vadd.f32 %v698, %v708
      %v711 = vmax.f32 %v710, 0.0
      %v712 = vpack.c.bf16 %v711, %v711
      %713 = vst [vmem:[%s168] sm:$0x3] %v712
      %p714 = scmp.lt.s32.totalorder %s14, 1
      %s715 = scalar_select %p714, %s14, 1
      %s716 = smul.addr %s715, 2
      %s717 = scalar_lea.vmem %s3, %s716
      // Predicated region
      $region33: #{model_forward.5} parent=31 // pred_check
        %p718 = pneg %p100
      $region34: #{model_forward.5} parent=31 // pred_check_branch
        %720 = sbr.rel (%p718) target = $region36
      $region35: #{model_forward.5} parent=31 // pred_region
        _
      $region36: #{model_forward.5} parent=31 // pred_fallthru
        _
    $region32: #{model_forward.5} parent=5 // pred_fallthru
      _
    %p721 = scmp.le.s32.totalorder 2, %s9
    // Predicated region
    $region37: #{model_forward.5} parent=5 // pred_check
      %p722 = pneg %p721
    $region38: #{model_forward.5} parent=5 // pred_check_branch
      %724 = sbr.rel (%p722) target = $region40
    $region39: #{model_forward.5} parent=5 // pred_region
      %s725 = ssub.s32 %s9, 2
      // Predicated region
      $region41: #{model_forward.5} parent=39 // pred_check
        %p726 = pneg %p106
      $region42: #{model_forward.5} parent=39 // pred_check_branch
        %728 = sbr.rel (%p726) target = $region44
      $region43: #{model_forward.5} parent=39 // pred_region
        %p729 = scmp.lt.s32.totalorder %s15, 1
        %s730 = scalar_select %p729, %s15, 1
        %s731 = smul.addr %s730, 2
        %s732 = scalar_lea.vmem %s3, %s731
      $region44: #{model_forward.5} parent=39 // pred_fallthru
        _
    $region40: #{model_forward.5} parent=5 // pred_fallthru
      _
  $region6: #{model_forward.5} parent=0 // loop_footer
    %s13 = sadd.s32 1, %s9
  $region7: #{model_forward.5} parent=0 // loop_footer_branch
    %8 = sbr.rel target = $region3
  $region8: #{model_forward.5} parent=0 // loop_exit
    _

// kernel: model_forward.7
$region0: #{model_forward.7}
  #allocation0 [shape = 'u32[]', space=smem, size = 0x4, offset = 0x4, fixed_abs, tag = 'smem constant byte address 0x4 - core index']
  #allocation1 [shape = 'u32[144,128]{1,0:T(1,128)}', space=vmem, size = 0x12000, scoped, tag = 'internal scratch']
  %s0 = inlined_call_operand.vmem [shape: bf16[2,10,160], index: 0, kind: input, shape index: {}]
  %s1 = inlined_call_operand.vmem [shape: bf16[3,160,128], index: 1, kind: input, shape index: {}]
  %s2 = inlined_call_operand.vmem [shape: f32[1,128], index: 2, kind: input, shape index: {}]
  %s3 = inlined_call_operand.vmem [shape: bf16[128,128], index: 3, kind: input, shape index: {}]
  %s4 = inlined_call_operand.vmem [shape: f32[1,128], index: 4, kind: input, shape index: {}]
  %s5 = inlined_call_operand.vmem [shape: f32[2,8,128], index: 5, kind: output, shape index: {}]
  %s6 = sld [smem:[#allocation0]]
  $region53: #{model_forward.7} parent=0
    _
  %s8 = ssub.s32 1, %s6
  %s9 = scalar_select 0, %s8, %s6
  loop: start=0, step=1, limit=4
  $region2: #{model_forward.7} parent=0 // loop_pre_header
    _
  $region3: #{model_forward.7} parent=0 // loop_header
    %s11 = sphi 0, %s15
    %p12 = scmp.ge.s32.totalorder %s11, 4
    %s21 = sphi 0, %s23
    %s24 = sphi 0, %s21
    %s25 = sphi 0, %s24
    %s41 = sphi 0, %s25
    %s45 = sphi 0, %s45
    %s47 = sphi 0, %s45
    %s48 = sphi 0, %s47
    %s62 = sphi 0, %s48
    %s66 = sphi 0, %s66
    %s68 = sphi 0, %s66
    %s69 = sphi 0, %s68
    %s83 = sphi 0, %s69
    %s87 = sphi 0, %s87
    %s89 = sphi 0, %s87
    %s90 = sphi 0, %s89
    %s104 = sphi 0, %s90
    %s108 = sphi 0, %s108
    %s110 = sphi 0, %s108
    %s111 = sphi 0, %s110
    %s125 = sphi 0, %s111
    %s131 = sphi 0, %s133
    %s134 = sphi 0, %s131
    %s135 = sphi 0, %s134
    %s151 = sphi 0, %s135
  $region4: #{model_forward.7} parent=0 // loop_header_branch
    %14 = sbr.rel (%p12) target = $region8
  $region5: #{model_forward.7} parent=0 // loop_body
    %s16 = ssub.s32 %s11, 1
    %s17 = ssub.s32 %s11, 2
    %s18 = sadd.s32 %s11, 1
    %s19 = ssub.s32 %s11, %s18
    %p20 = scmp.eq.s32.totalorder %s19, 0
    %s22 = sadd.s32 %s21, 1
    %s23 = scalar_select %p20, %s21, %s22
    %p26 = pneg %p20
    %p27 = scmp.eq.s32.totalorder %s11, 1
    %p28 = por %p26, %p27
    %p29 = scmp.ne.s32.totalorder %s21, %s24
    %p30 = scmp.eq.s32.totalorder %s11, 0
    %p31 = por %p29, %p30
    %p32 = scmp.ne.s32.totalorder %s21, %s24
    %p33 = scmp.eq.s32.totalorder %s16, 1
    %p34 = por %p32, %p33
    %p35 = scmp.ne.s32.totalorder %s24, %s25
    %p36 = scmp.eq.s32.totalorder %s16, 0
    %p37 = por %p35, %p36
    %p38 = scmp.ne.s32.totalorder %s24, %s25
    %p39 = scmp.eq.s32.totalorder %s17, 1
    %p40 = por %p38, %p39
    %p42 = scmp.ne.s32.totalorder %s25, %s41
    %p43 = scmp.eq.s32.totalorder %s17, 0
    %p44 = por %p42, %p43
    %s46 = sadd.s32 %s45, 1
    %p49 = scmp.eq.s32.totalorder %s11, 1
    %p50 = scmp.ne.s32.totalorder %s45, %s47
    %p51 = scmp.eq.s32.totalorder %s11, 0
    %p52 = por %p50, %p51
    %p53 = scmp.ne.s32.totalorder %s45, %s47
    %p54 = scmp.eq.s32.totalorder %s16, 1
    %p55 = por %p53, %p54
    %p56 = scmp.ne.s32.totalorder %s47, %s48
    %p57 = scmp.eq.s32.totalorder %s16, 0
    %p58 = por %p56, %p57
    %p59 = scmp.ne.s32.totalorder %s47, %s48
    %p60 = scmp.eq.s32.totalorder %s17, 1
    %p61 = por %p59, %p60
    %p63 = scmp.ne.s32.totalorder %s48, %s62
    %p64 = scmp.eq.s32.totalorder %s17, 0
    %p65 = por %p63, %p64
    %s67 = sadd.s32 %s66, 1
    %p70 = scmp.eq.s32.totalorder %s11, 1
    %p71 = scmp.ne.s32.totalorder %s66, %s68
    %p72 = scmp.eq.s32.totalorder %s11, 0
    %p73 = por %p71, %p72
    %p74 = scmp.ne.s32.totalorder %s66, %s68
    %p75 = scmp.eq.s32.totalorder %s16, 1
    %p76 = por %p74, %p75
    %p77 = scmp.ne.s32.totalorder %s68, %s69
    %p78 = scmp.eq.s32.totalorder %s16, 0
    %p79 = por %p77, %p78
    %p80 = scmp.ne.s32.totalorder %s68, %s69
    %p81 = scmp.eq.s32.totalorder %s17, 1
    %p82 = por %p80, %p81
    %p84 = scmp.ne.s32.totalorder %s69, %s83
    %p85 = scmp.eq.s32.totalorder %s17, 0
    %p86 = por %p84, %p85
    %s88 = sadd.s32 %s87, 1
    %p91 = scmp.eq.s32.totalorder %s11, 1
    %p92 = scmp.ne.s32.totalorder %s87, %s89
    %p93 = scmp.eq.s32.totalorder %s11, 0
    %p94 = por %p92, %p93
    %p95 = scmp.ne.s32.totalorder %s87, %s89
    %p96 = scmp.eq.s32.totalorder %s16, 1
    %p97 = por %p95, %p96
    %p98 = scmp.ne.s32.totalorder %s89, %s90
    %p99 = scmp.eq.s32.totalorder %s16, 0
    %p100 = por %p98, %p99
    %p101 = scmp.ne.s32.totalorder %s89, %s90
    %p102 = scmp.eq.s32.totalorder %s17, 1
    %p103 = por %p101, %p102
    %p105 = scmp.ne.s32.totalorder %s90, %s104
    %p106 = scmp.eq.s32.totalorder %s17, 0
    %p107 = por %p105, %p106
    %s109 = sadd.s32 %s108, 1
    %p112 = scmp.eq.s32.totalorder %s11, 1
    %p113 = scmp.ne.s32.totalorder %s108, %s110
    %p114 = scmp.eq.s32.totalorder %s11, 0
    %p115 = por %p113, %p114
    %p116 = scmp.ne.s32.totalorder %s108, %s110
    %p117 = scmp.eq.s32.totalorder %s16, 1
    %p118 = por %p116, %p117
    %p119 = scmp.ne.s32.totalorder %s110, %s111
    %p120 = scmp.eq.s32.totalorder %s16, 0
    %p121 = por %p119, %p120
    %p122 = scmp.ne.s32.totalorder %s110, %s111
    %p123 = scmp.eq.s32.totalorder %s17, 1
    %p124 = por %p122, %p123
    %p126 = scmp.ne.s32.totalorder %s111, %s125
    %p127 = scmp.eq.s32.totalorder %s17, 0
    %p128 = por %p126, %p127
    %s129 = ssub.s32 %s11, %s18
    %p130 = scmp.eq.s32.totalorder %s129, 0
    %s132 = sadd.s32 %s131, 1
    %s133 = scalar_select %p130, %s131, %s132
    %p136 = pneg %p130
    %p137 = scmp.eq.s32.totalorder %s11, 1
    %p138 = por %p136, %p137
    %p139 = scmp.ne.s32.totalorder %s131, %s134
    %p140 = scmp.eq.s32.totalorder %s11, 0
    %p141 = por %p139, %p140
    %p142 = scmp.ne.s32.totalorder %s131, %s134
    %p143 = scmp.eq.s32.totalorder %s16, 1
    %p144 = por %p142, %p143
    %p145 = scmp.ne.s32.totalorder %s134, %s135
    %p146 = scmp.eq.s32.totalorder %s16, 0
    %p147 = por %p145, %p146
    %p148 = scmp.ne.s32.totalorder %s134, %s135
    %p149 = scmp.eq.s32.totalorder %s17, 1
    %p150 = por %p148, %p149
    %p152 = scmp.ne.s32.totalorder %s135, %s151
    %p153 = scmp.eq.s32.totalorder %s17, 0
    %p154 = por %p152, %p153
    %p155 = scmp.le.s32.totalorder 1, %s11
    %p156 = scmp.lt.s32.totalorder %s11, 3
    %p157 = pnand %p155, %p156
    %p158 = pneg %p157
    // Predicated region
    $region9: #{model_forward.7} parent=5 // pred_check
      _
    $region10: #{model_forward.7} parent=5 // pred_check_branch
      %160 = sbr.rel (%p157) target = $region12
    $region11: #{model_forward.7} parent=5 // pred_region
      %s161 = ssub.s32 %s11, 1
      // Predicated region
      $region13: #{model_forward.7} parent=11 // pred_check
        %p162 = pneg %p58
      $region14: #{model_forward.7} parent=11 // pred_check_branch
        %164 = sbr.rel (%p162) target = $region16
      $region15: #{model_forward.7} parent=11 // pred_region
        _
      $region16: #{model_forward.7} parent=11 // pred_fallthru
        _
      // Predicated region
      $region17: #{model_forward.7} parent=11 // pred_check
        %p165 = pneg %p79
      $region18: #{model_forward.7} parent=11 // pred_check_branch
        %167 = sbr.rel (%p165) target = $region20
      $region19: #{model_forward.7} parent=11 // pred_region
        _
      $region20: #{model_forward.7} parent=11 // pred_fallthru
        _
      // Predicated region
      $region21: #{model_forward.7} parent=11 // pred_check
        %p168 = pneg %p100
      $region22: #{model_forward.7} parent=11 // pred_check_branch
        %170 = sbr.rel (%p168) target = $region24
      $region23: #{model_forward.7} parent=11 // pred_region
        _
      $region24: #{model_forward.7} parent=11 // pred_fallthru
        _
      // Predicated region
      $region25: #{model_forward.7} parent=11 // pred_check
        %p171 = pneg %p121
      $region26: #{model_forward.7} parent=11 // pred_check_branch
        %173 = sbr.rel (%p171) target = $region28
      $region27: #{model_forward.7} parent=11 // pred_region
        _
      $region28: #{model_forward.7} parent=11 // pred_fallthru
        _
    $region12: #{model_forward.7} parent=5 // pred_fallthru
      _
    %p174 = scmp.lt.s32.totalorder %s11, 2
    // Predicated region
    $region29: #{model_forward.7} parent=5 // pred_check
      %p175 = pneg %p174
    $region30: #{model_forward.7} parent=5 // pred_check_branch
      %177 = sbr.rel (%p175) target = $region32
    $region31: #{model_forward.7} parent=5 // pred_region
      // Predicated region
      $region33: #{model_forward.7} parent=31 // pred_check
        %p178 = pneg %p31
      $region34: #{model_forward.7} parent=31 // pred_check_branch
        %180 = sbr.rel (%p178) target = $region36
      $region35: #{model_forward.7} parent=31 // pred_region
        %p181 = scmp.lt.s32.totalorder %s11, 1
        %s182 = scalar_select %p181, %s11, 1
        %s183 = smul.addr %s182, 4
        %s184 = smul.addr %s183, 4
        %s185 = scalar_lea.vmem %s0, %s184
      $region36: #{model_forward.7} parent=31 // pred_fallthru
        _
    $region32: #{model_forward.7} parent=5 // pred_fallthru
      _
    %p186 = scmp.le.s32.totalorder 1, %s11
    %p187 = scmp.lt.s32.totalorder %s11, 3
    %p188 = pnand %p186, %p187
    %p189 = pneg %p188
    // Predicated region
    $region37: #{model_forward.7} parent=5 // pred_check
      _
    $region38: #{model_forward.7} parent=5 // pred_check_branch
      %191 = sbr.rel (%p188) target = $region40
    $region39: #{model_forward.7} parent=5 // pred_region
      %s192 = ssub.s32 %s11, 1
      %p193 = scmp.lt.s32.totalorder %s16, 1
      %s194 = scalar_select %p193, %s16, 1
      %s195 = smul.addr %s194, 4
      %s196 = smul.addr %s195, 4
      %s197 = scalar_lea.vmem %s0, %s196
      %p198 = pneg %p37
      %p199 = pneg %p34
      %p200 = pneg %p58
      %p201 = pneg %p55
      %p202 = pneg %p79
      %p203 = pneg %p76
      %p204 = pneg %p100
      %p205 = pneg %p97
      %p206 = pneg %p121
      %p207 = pneg %p118
      %p208 = pneg %p147
      %p209 = pneg %p144
      %p210 = scmp.lt.s32.totalorder %s16, 1
      %s211 = scalar_select %p210, %s16, 1
      %s212 = smul.addr %s211, 8
      %s213 = scalar_lea.vmem %s5, %s212
      %p214 = scmp.lt.s32.totalorder %s16, 1
      %s215 = scalar_select %p214, %s16, 1
      %s216 = smul.addr %s215, 4
      %s217 = smul.addr %s216, 4
      %s218 = scalar_lea.vmem %s0, %s217
      %p219 = scmp.lt.s32.totalorder %s16, 1
      %s220 = scalar_select %p219, %s16, 1
      %s221 = smul.addr %s220, 8
      %s222 = scalar_lea.vmem %s5, %s221
      %v224 = vld [vmem:[%s218] sm:$0xff]
      %v225 = vld [vmem:[%s1] sm:$0xf]
      %v226 = vld [vmem:[%s1 + $0x4] sm:$0xf]
      %v227 = vld [vmem:[%s1 + $0x8] sm:$0xf]
      %v228 = vld [vmem:[%s1 + $0xc] sm:$0xf]
      %v229 = vld [vmem:[%s1 + $0x10] sm:$0xf]
      %v230 = vld [vmem:[%s1 + $0x14] sm:$0xf]
      %v231 = vld [vmem:[%s1 + $0x18] sm:$0xf]
      %v232 = vld [vmem:[%s1 + $0x1c] sm:$0xf]
      %v233 = vld [vmem:[%s1 + $0x20] sm:$0xf]
      %v234 = vld [vmem:[%s1 + $0x24] sm:$0xf]
      %v235 = vld [vmem:[%s1 + $0x28] sm:$0xf]
      %v236 = vld [vmem:[%s1 + $0x2c] sm:$0xf]
      %v237 = vld [vmem:[%s1 + $0x30] sm:$0xf]
      %v238 = vld [vmem:[%s1 + $0x34] sm:$0xf]
      %v239 = vld [vmem:[%s1 + $0x38] sm:$0xf]
      %v240 = vld [vmem:[%s1 + $0x3c] sm:$0xf]
      %v241 = vld [vmem:[%s1 + $0x40] sm:$0xf]
      %v242 = vld [vmem:[%s1 + $0x44] sm:$0xf]
      %v243 = vld [vmem:[%s1 + $0x48] sm:$0xf]
      %v244 = vld [vmem:[%s1 + $0x4c] sm:$0xf]
      %v245 = vld [vmem:[%s218 + $0x8] sm:$0x11]
      %s246 = scalar_lea.vmem %s1, 80
      %v247 = vld [vmem:[%s246] sm:$0xf]
      %v248 = vld [vmem:[%s246 + $0x4] sm:$0xf]
      %v249 = vld [vmem:[%s246 + $0x8] sm:$0xf]
      %v250 = vld [vmem:[%s246 + $0xc] sm:$0xf]
      %v251 = vld [vmem:[%s246 + $0x10] sm:$0xf]
      %v252 = vld [vmem:[%s246 + $0x14] sm:$0xf]
      %v253 = vld [vmem:[%s246 + $0x18] sm:$0xf]
      %v254 = vld [vmem:[%s246 + $0x1c] sm:$0xf]
      %v255 = vld [vmem:[%s246 + $0x20] sm:$0xf]
      %v256 = vld [vmem:[%s246 + $0x24] sm:$0xf]
      %v257 = vld [vmem:[%s246 + $0x28] sm:$0xf]
      %v258 = vld [vmem:[%s246 + $0x2c] sm:$0xf]
      %v259 = vld [vmem:[%s246 + $0x30] sm:$0xf]
      %v260 = vld [vmem:[%s246 + $0x34] sm:$0xf]
      %v261 = vld [vmem:[%s246 + $0x38] sm:$0xf]
      %v262 = vld [vmem:[%s246 + $0x3c] sm:$0xf]
      %v263 = vld [vmem:[%s246 + $0x40] sm:$0xf]
      %v264 = vld [vmem:[%s246 + $0x44] sm:$0xf]
      %v265 = vld [vmem:[%s246 + $0x48] sm:$0xf]
      %v266 = vld [vmem:[%s246 + $0x4c] sm:$0xf]
      %v269 = vunpack.c.l.b16 %v224
      %v270 = vunpack.c.h.b16 %v224
      %v271 = vunpack.c.l.b16 %v245
      %v272 = vunpack.c.h.b16 %v245
      %v273 = vpack.c.b16 %v271, %v269
      %v274 = vpack.c.b16 %v272, %v270
      %v276 = vshrl.u32 %v273, 16
      %v278 = vshll.u32 %v273, 16
      %v280 = vrot.slane %v278, 1
      %v281 = vor.u32 %v276, %v280
      %v283 = vshrl.u32 %v274, 16
      %v285 = vshll.u32 %v274, 16
      %v287 = vrot.slane %v285, 1
      %v288 = vor.u32 %v283, %v287
      %v310 = vunpack.c.l.b16 %v247
      %v311 = vunpack.c.l.b16 %v248
      %v312 = vunpack.c.l.b16 %v249
      %v313 = vunpack.c.l.b16 %v250
      %v314 = vunpack.c.l.b16 %v251
      %v315 = vunpack.c.l.b16 %v252
      %v316 = vunpack.c.l.b16 %v253
      %v317 = vunpack.c.l.b16 %v254
      %v318 = vunpack.c.l.b16 %v255
      %v319 = vunpack.c.l.b16 %v256
      %v320 = vunpack.c.l.b16 %v257
      %v321 = vunpack.c.l.b16 %v258
      %v322 = vunpack.c.l.b16 %v259
      %v323 = vunpack.c.l.b16 %v260
      %v324 = vunpack.c.l.b16 %v261
      %v325 = vunpack.c.l.b16 %v262
      %v326 = vunpack.c.l.b16 %v263
      %v327 = vunpack.c.l.b16 %v264
      %v328 = vunpack.c.l.b16 %v265
      %v329 = vunpack.c.l.b16 %v266
      %v330 = vpack.c.b16 %v311, %v310
      %v331 = vpack.c.b16 %v313, %v312
      %v332 = vpack.c.b16 %v315, %v314
      %v333 = vpack.c.b16 %v317, %v316
      %v334 = vpack.c.b16 %v319, %v318
      %v335 = vpack.c.b16 %v321, %v320
      %v336 = vpack.c.b16 %v323, %v322
      %v337 = vpack.c.b16 %v325, %v324
      %v338 = vpack.c.b16 %v327, %v326
      %v339 = vpack.c.b16 %v329, %v328
      %vm350 = vcmask 261120
      %v352 = vsel %vm350, %v288, 0
      %354 = vmatprep.subr.bf16.mxu0 0
      %355 = vmatpush1.bf16.msra.mxu0 %v330
      %356 = vmatprep.subr.bf16.mxu0 0
      %357 = vmatpush1.bf16.msra.mxu0 %v331
      %358 = vmatprep.subr.bf16.mxu0 0
      %359 = vmatpush1.bf16.msra.mxu0 %v332
      %360 = vmatprep.subr.bf16.mxu0 0
      %361 = vmatpush1.bf16.msra.mxu0 %v333
      %362 = vmatprep.subr.bf16.mxu0 0
      %363 = vmatpush1.bf16.msra.mxu0 %v334
      %364 = vmatprep.subr.bf16.mxu0 0
      %365 = vmatpush1.bf16.msra.mxu0 %v335
      %366 = vmatprep.subr.bf16.mxu0 0
      %367 = vmatpush1.bf16.msra.mxu0 %v336
      %368 = vmatprep.subr.bf16.mxu0 0
      %369 = vmatpush1.bf16.msra.mxu0 %v337
      %370 = vmatprep.subr.bf16.mxu0 0
      %371 = vmatpush1.bf16.msra.mxu0 %v338
      %372 = vmatprep.subr.bf16.mxu0 0
      %373 = vmatpush1.bf16.msra.mxu0 %v339
      %374 = vmatprep.subr.bf16.mxu0 0
      %375 = vmatpush1.bf16.msra.mxu0 0
      %376 = vmatprep.subr.bf16.mxu0 0
      %377 = vmatpush1.bf16.msra.mxu0 0
      %378 = vmatprep.subr.bf16.mxu0 0
      %379 = vmatpush1.bf16.msra.mxu0 0
      %380 = vmatprep.subr.bf16.mxu0 0
      %381 = vmatpush1.bf16.msra.mxu0 0
      %382 = vmatprep.subr.bf16.mxu0 0
      %383 = vmatpush1.bf16.msra.mxu0 0
      %384 = vmatprep.subr.bf16.mxu0 0
      %385 = vmatpush1.bf16.msra.mxu0 0
      %386 = vmatprep.mubr.bf16.mxu0 %v352
      %387 = vmatmul.mubr.bf16.gmra.mrb[0].mxu0 %v281
      %v388 = vpop.f32.mrb[0].mxu0
      %v389 = vadd.f32 0.0, %v388
      %v390 = vpop.f32.mrb[0].mxu0
      %v391 = vpop.f32.mrb[0].mxu0
      %v392 = vpop.f32.mrb[0].mxu0
      %393 = vdwg.mxu0
      %v394 = vpack.c.b16 %v269, %v269
      %v395 = vpack.c.b16 %v270, %v270
      %v417 = vunpack.c.l.b16 %v225
      %v418 = vunpack.c.l.b16 %v226
      %v419 = vunpack.c.l.b16 %v227
      %v420 = vunpack.c.l.b16 %v228
      %v421 = vunpack.c.l.b16 %v229
      %v422 = vunpack.c.l.b16 %v230
      %v423 = vunpack.c.l.b16 %v231
      %v424 = vunpack.c.l.b16 %v232
      %v425 = vunpack.c.l.b16 %v233
      %v426 = vunpack.c.l.b16 %v234
      %v427 = vunpack.c.l.b16 %v235
      %v428 = vunpack.c.l.b16 %v236
      %v429 = vunpack.c.l.b16 %v237
      %v430 = vunpack.c.l.b16 %v238
      %v431 = vunpack.c.l.b16 %v239
      %v432 = vunpack.c.l.b16 %v240
      %v433 = vunpack.c.l.b16 %v241
      %v434 = vunpack.c.l.b16 %v242
      %v435 = vunpack.c.l.b16 %v243
      %v436 = vunpack.c.l.b16 %v244
      %v437 = vpack.c.b16 %v418, %v417
      %v438 = vpack.c.b16 %v420, %v419
      %v439 = vpack.c.b16 %v422, %v421
      %v440 = vpack.c.b16 %v424, %v423
      %v441 = vpack.c.b16 %v426, %v425
      %v442 = vpack.c.b16 %v428, %v427
      %v443 = vpack.c.b16 %v430, %v429
      %v444 = vpack.c.b16 %v432, %v431
      %v445 = vpack.c.b16 %v434, %v433
      %v446 = vpack.c.b16 %v436, %v435
      %v458 = vsel %vm350, %v395, 0
      %460 = vmatprep.subr.bf16.mxu0 0
      %461 = vmatpush1.bf16.msra.mxu0 %v437
      %462 = vmatprep.subr.bf16.mxu0 0
      %463 = vmatpush1.bf16.msra.mxu0 %v438
      %464 = vmatprep.subr.bf16.mxu0 0
      %465 = vmatpush1.bf16.msra.mxu0 %v439
      %466 = vmatprep.subr.bf16.mxu0 0
      %467 = vmatpush1.bf16.msra.mxu0 %v440
      %468 = vmatprep.subr.bf16.mxu0 0
      %469 = vmatpush1.bf16.msra.mxu0 %v441
      %470 = vmatprep.subr.bf16.mxu0 0
      %471 = vmatpush1.bf16.msra.mxu0 %v442
      %472 = vmatprep.subr.bf16.mxu0 0
      %473 = vmatpush1.bf16.msra.mxu0 %v443
      %474 = vmatprep.subr.bf16.mxu0 0
      %475 = vmatpush1.bf16.msra.mxu0 %v444
      %476 = vmatprep.subr.bf16.mxu0 0
      %477 = vmatpush1.bf16.msra.mxu0 %v445
      %478 = vmatprep.subr.bf16.mxu0 0
      %479 = vmatpush1.bf16.msra.mxu0 %v446
      %480 = vmatprep.subr.bf16.mxu0 0
      %481 = vmatpush1.bf16.msra.mxu0 0
      %482 = vmatprep.subr.bf16.mxu0 0
      %483 = vmatpush1.bf16.msra.mxu0 0
      %484 = vmatprep.subr.bf16.mxu0 0
      %485 = vmatpush1.bf16.msra.mxu0 0
      %486 = vmatprep.subr.bf16.mxu0 0
      %487 = vmatpush1.bf16.msra.mxu0 0
      %488 = vmatprep.subr.bf16.mxu0 0
      %489 = vmatpush1.bf16.msra.mxu0 0
      %490 = vmatprep.subr.bf16.mxu0 0
      %491 = vmatpush1.bf16.msra.mxu0 0
      %492 = vmatprep.mubr.bf16.mxu0 %v458
      %493 = vmatmul.mubr.bf16.gmra.mrb[0].mxu0 %v394
      %v494 = vpop.f32.mrb[0].mxu0
      %v495 = vadd.f32 %v389, %v494
      %v496 = vpop.f32.mrb[0].mxu0
      %v497 = vpop.f32.mrb[0].mxu0
      %v498 = vpop.f32.mrb[0].mxu0
      %499 = vdwg.mxu0
      %v500 = vld [vmem:[%s218] sm:$0xee]
      %s501 = scalar_lea.vmem %s1, 160
      %v502 = vld [vmem:[%s501] sm:$0xf]
      %v503 = vld [vmem:[%s501 + $0x4] sm:$0xf]
      %v504 = vld [vmem:[%s501 + $0x8] sm:$0xf]
      %v505 = vld [vmem:[%s501 + $0xc] sm:$0xf]
      %v506 = vld [vmem:[%s501 + $0x10] sm:$0xf]
      %v507 = vld [vmem:[%s501 + $0x14] sm:$0xf]
      %v508 = vld [vmem:[%s501 + $0x18] sm:$0xf]
      %v509 = vld [vmem:[%s501 + $0x1c] sm:$0xf]
      %v510 = vld [vmem:[%s501 + $0x20] sm:$0xf]
      %v511 = vld [vmem:[%s501 + $0x24] sm:$0xf]
      %v512 = vld [vmem:[%s501 + $0x28] sm:$0xf]
      %v513 = vld [vmem:[%s501 + $0x2c] sm:$0xf]
      %v514 = vld [vmem:[%s501 + $0x30] sm:$0xf]
      %v515 = vld [vmem:[%s501 + $0x34] sm:$0xf]
      %v516 = vld [vmem:[%s501 + $0x38] sm:$0xf]
      %v517 = vld [vmem:[%s501 + $0x3c] sm:$0xf]
      %v518 = vld [vmem:[%s501 + $0x40] sm:$0xf]
      %v519 = vld [vmem:[%s501 + $0x44] sm:$0xf]
      %v520 = vld [vmem:[%s501 + $0x48] sm:$0xf]
      %v521 = vld [vmem:[%s501 + $0x4c] sm:$0xf]
      %v523 = vunpack.c.l.b16 %v500
      %v524 = vunpack.c.h.b16 %v500
      %v525 = vpack.c.b16 %v271, %v523
      %v526 = vpack.c.b16 %v272, %v524
      %v527 = vrot.slane %v525, 1
      %v528 = vrot.slane %v526, 1
      %v550 = vunpack.c.l.b16 %v502
      %v551 = vunpack.c.l.b16 %v503
      %v552 = vunpack.c.l.b16 %v504
      %v553 = vunpack.c.l.b16 %v505
      %v554 = vunpack.c.l.b16 %v506
      %v555 = vunpack.c.l.b16 %v507
      %v556 = vunpack.c.l.b16 %v508
      %v557 = vunpack.c.l.b16 %v509
      %v558 = vunpack.c.l.b16 %v510
      %v559 = vunpack.c.l.b16 %v511
      %v560 = vunpack.c.l.b16 %v512
      %v561 = vunpack.c.l.b16 %v513
      %v562 = vunpack.c.l.b16 %v514
      %v563 = vunpack.c.l.b16 %v515
      %v564 = vunpack.c.l.b16 %v516
      %v565 = vunpack.c.l.b16 %v517
      %v566 = vunpack.c.l.b16 %v518
      %v567 = vunpack.c.l.b16 %v519
      %v568 = vunpack.c.l.b16 %v520
      %v569 = vunpack.c.l.b16 %v521
      %v570 = vpack.c.b16 %v551, %v550
      %v571 = vpack.c.b16 %v553, %v552
      %v572 = vpack.c.b16 %v555, %v554
      %v573 = vpack.c.b16 %v557, %v556
      %v574 = vpack.c.b16 %v559, %v558
      %v575 = vpack.c.b16 %v561, %v560
      %v576 = vpack.c.b16 %v563, %v562
      %v577 = vpack.c.b16 %v565, %v564
      %v578 = vpack.c.b16 %v567, %v566
      %v579 = vpack.c.b16 %v569, %v568
      %v591 = vsel %vm350, %v528, 0
      %593 = vmatprep.subr.bf16.mxu0 0
      %594 = vmatpush1.bf16.msra.mxu0 %v570
      %595 = vmatprep.subr.bf16.mxu0 0
      %596 = vmatpush1.bf16.msra.mxu0 %v571
      %597 = vmatprep.subr.bf16.mxu0 0
      %598 = vmatpush1.bf16.msra.mxu0 %v572
      %599 = vmatprep.subr.bf16.mxu0 0
      %600 = vmatpush1.bf16.msra.mxu0 %v573
      %601 = vmatprep.subr.bf16.mxu0 0
      %602 = vmatpush1.bf16.msra.mxu0 %v574
      %603 = vmatprep.subr.bf16.mxu0 0
      %604 = vmatpush1.bf16.msra.mxu0 %v575
      %605 = vmatprep.subr.bf16.mxu0 0
      %606 = vmatpush1.bf16.msra.mxu0 %v576
      %607 = vmatprep.subr.bf16.mxu0 0
      %608 = vmatpush1.bf16.msra.mxu0 %v577
      %609 = vmatprep.subr.bf16.mxu0 0
      %610 = vmatpush1.bf16.msra.mxu0 %v578
      %611 = vmatprep.subr.bf16.mxu0 0
      %612 = vmatpush1.bf16.msra.mxu0 %v579
      %613 = vmatprep.subr.bf16.mxu0 0
      %614 = vmatpush1.bf16.msra.mxu0 0
      %615 = vmatprep.subr.bf16.mxu0 0
      %616 = vmatpush1.bf16.msra.mxu0 0
      %617 = vmatprep.subr.bf16.mxu0 0
      %618 = vmatpush1.bf16.msra.mxu0 0
      %619 = vmatprep.subr.bf16.mxu0 0
      %620 = vmatpush1.bf16.msra.mxu0 0
      %621 = vmatprep.subr.bf16.mxu0 0
      %622 = vmatpush1.bf16.msra.mxu0 0
      %623 = vmatprep.subr.bf16.mxu0 0
      %624 = vmatpush1.bf16.msra.mxu0 0
      %625 = vmatprep.mubr.bf16.mxu0 %v591
      %626 = vmatmul.mubr.bf16.gmra.mrb[0].mxu0 %v527
      %v627 = vpop.f32.mrb[0].mxu0
      %v628 = vadd.f32 0.0, %v627
      %v629 = vpop.f32.mrb[0].mxu0
      %v630 = vpop.f32.mrb[0].mxu0
      %v631 = vpop.f32.mrb[0].mxu0
      %632 = vdwg.mxu0
      %v633 = vadd.f32 %v495, %v628
      %v634 = vld [vmem:[%s2] sm:$0x1]
      %v636 = vlaneseq
      %v637 = vshrl.u32 %v636, 7
      %v638 = vsub.s32 0, %v637
      %v639 = vrot.slane %v634, %v638
      %v641 = vadd.f32 %v633, %v639
      %v642 = vmax.f32 %v641, 0.0
      %v643 = vpack.c.bf16 %v642, %v642
      %v644 = vld [vmem:[%s3] sm:$0xf]
      %v645 = vld [vmem:[%s3 + $0x4] sm:$0xf]
      %v646 = vld [vmem:[%s3 + $0x8] sm:$0xf]
      %v647 = vld [vmem:[%s3 + $0xc] sm:$0xf]
      %v648 = vld [vmem:[%s3 + $0x10] sm:$0xf]
      %v649 = vld [vmem:[%s3 + $0x14] sm:$0xf]
      %v650 = vld [vmem:[%s3 + $0x18] sm:$0xf]
      %v651 = vld [vmem:[%s3 + $0x1c] sm:$0xf]
      %v652 = vld [vmem:[%s3 + $0x20] sm:$0xf]
      %v653 = vld [vmem:[%s3 + $0x24] sm:$0xf]
      %v654 = vld [vmem:[%s3 + $0x28] sm:$0xf]
      %v655 = vld [vmem:[%s3 + $0x2c] sm:$0xf]
      %v656 = vld [vmem:[%s3 + $0x30] sm:$0xf]
      %v657 = vld [vmem:[%s3 + $0x34] sm:$0xf]
      %v658 = vld [vmem:[%s3 + $0x38] sm:$0xf]
      %v659 = vld [vmem:[%s3 + $0x3c] sm:$0xf]
      %v660 = vld [vmem:[%s4] sm:$0x1]
      %v662 = vlaneseq
      %v663 = vshrl.u32 %v662, 7
      %v664 = vsub.s32 0, %v663
      %v665 = vrot.slane %v660, %v664
      %v683 = vunpack.c.l.b16 %v644
      %v684 = vunpack.c.l.b16 %v645
      %v685 = vunpack.c.l.b16 %v646
      %v686 = vunpack.c.l.b16 %v647
      %v687 = vunpack.c.l.b16 %v648
      %v688 = vunpack.c.l.b16 %v649
      %v689 = vunpack.c.l.b16 %v650
      %v690 = vunpack.c.l.b16 %v651
      %v691 = vunpack.c.l.b16 %v652
      %v692 = vunpack.c.l.b16 %v653
      %v693 = vunpack.c.l.b16 %v654
      %v694 = vunpack.c.l.b16 %v655
      %v695 = vunpack.c.l.b16 %v656
      %v696 = vunpack.c.l.b16 %v657
      %v697 = vunpack.c.l.b16 %v658
      %v698 = vunpack.c.l.b16 %v659
      %v699 = vpack.c.b16 %v684, %v683
      %v700 = vpack.c.b16 %v686, %v685
      %v701 = vpack.c.b16 %v688, %v687
      %v702 = vpack.c.b16 %v690, %v689
      %v703 = vpack.c.b16 %v692, %v691
      %v704 = vpack.c.b16 %v694, %v693
      %v705 = vpack.c.b16 %v696, %v695
      %v706 = vpack.c.b16 %v698, %v697
      %715 = vmatprep.subr.bf16.mxu0 0
      %716 = vmatpush1.bf16.msra.mxu0 %v699
      %717 = vmatprep.subr.bf16.mxu0 0
      %718 = vmatpush1.bf16.msra.mxu0 %v700
      %719 = vmatprep.subr.bf16.mxu0 0
      %720 = vmatpush1.bf16.msra.mxu0 %v701
      %721 = vmatprep.subr.bf16.mxu0 0
      %722 = vmatpush1.bf16.msra.mxu0 %v702
      %723 = vmatprep.subr.bf16.mxu0 0
      %724 = vmatpush1.bf16.msra.mxu0 %v703
      %725 = vmatprep.subr.bf16.mxu0 0
      %726 = vmatpush1.bf16.msra.mxu0 %v704
      %727 = vmatprep.subr.bf16.mxu0 0
      %728 = vmatpush1.bf16.msra.mxu0 %v705
      %729 = vmatprep.subr.bf16.mxu0 0
      %730 = vmatpush1.bf16.msra.mxu0 %v706
      %731 = vmatprep.subr.bf16.mxu0 0
      %732 = vmatpush1.bf16.msra.mxu0 0
      %733 = vmatprep.subr.bf16.mxu0 0
      %734 = vmatpush1.bf16.msra.mxu0 0
      %735 = vmatprep.subr.bf16.mxu0 0
      %736 = vmatpush1.bf16.msra.mxu0 0
      %737 = vmatprep.subr.bf16.mxu0 0
      %738 = vmatpush1.bf16.msra.mxu0 0
      %739 = vmatprep.subr.bf16.mxu0 0
      %740 = vmatpush1.bf16.msra.mxu0 0
      %741 = vmatprep.subr.bf16.mxu0 0
      %742 = vmatpush1.bf16.msra.mxu0 0
      %743 = vmatprep.subr.bf16.mxu0 0
      %744 = vmatpush1.bf16.msra.mxu0 0
      %745 = vmatprep.subr.bf16.mxu0 0
      %746 = vmatpush1.bf16.msra.mxu0 0
      %747 = vmatprep.mubr.bf16.mxu0 0
      %748 = vmatmul.mubr.bf16.gmra.mrb[0].mxu0 %v643
      %v749 = vpop.f32.mrb[0].mxu0
      %v750 = vadd.f32 %v665, %v749
      %v751 = vpop.f32.mrb[0].mxu0
      %v752 = vpop.f32.mrb[0].mxu0
      %v753 = vpop.f32.mrb[0].mxu0
      %754 = vdwg.mxu0
      %755 = vst [vmem:[%s222] sm:$0xff] %v750
      %p756 = scmp.lt.s32.totalorder %s16, 1
      %s757 = scalar_select %p756, %s16, 1
      %s758 = smul.addr %s757, 8
      %s759 = scalar_lea.vmem %s5, %s758
      // Predicated region
      $region41: #{model_forward.7} parent=39 // pred_check
        %p760 = pneg %p144
      $region42: #{model_forward.7} parent=39 // pred_check_branch
        %762 = sbr.rel (%p760) target = $region44
      $region43: #{model_forward.7} parent=39 // pred_region
        _
      $region44: #{model_forward.7} parent=39 // pred_fallthru
        _
    $region40: #{model_forward.7} parent=5 // pred_fallthru
      _
    %p763 = scmp.le.s32.totalorder 2, %s11
    // Predicated region
    $region45: #{model_forward.7} parent=5 // pred_check
      %p764 = pneg %p763
    $region46: #{model_forward.7} parent=5 // pred_check_branch
      %766 = sbr.rel (%p764) target = $region48
    $region47: #{model_forward.7} parent=5 // pred_region
      %s767 = ssub.s32 %s11, 2
      // Predicated region
      $region49: #{model_forward.7} parent=47 // pred_check
        %p768 = pneg %p150
      $region50: #{model_forward.7} parent=47 // pred_check_branch
        %770 = sbr.rel (%p768) target = $region52
      $region51: #{model_forward.7} parent=47 // pred_region
        %p771 = scmp.lt.s32.totalorder %s17, 1
        %s772 = scalar_select %p771, %s17, 1
        %s773 = smul.addr %s772, 8
        %s774 = scalar_lea.vmem %s5, %s773
      $region52: #{model_forward.7} parent=47 // pred_fallthru
        _
    $region48: #{model_forward.7} parent=5 // pred_fallthru
      _
  $region6: #{model_forward.7} parent=0 // loop_footer
    %s15 = sadd.s32 1, %s11
  $region7: #{model_forward.7} parent=0 // loop_footer_branch
    %10 = sbr.rel target = $region3
  $region8: #{model_forward.7} parent=0 // loop_exit
    _

</llo_original>
